<compile_context>
chip_gen: v5e
topology: v5e:2x2
jax: 0.10.0
libtpu: 0.0.40
codegen_flags: <defaults>
</compile_context>

<pallas_src>
import functools

import jax
import jax.numpy as jnp
from jax.experimental import pallas as pl
from jax.experimental.pallas import tpu as pltpu


def _round_up(x, m):
    return (x + m - 1) // m * m


@functools.lru_cache(maxsize=1)
def _vmem_limit_bytes():
    """Generation-aware scoped-VMEM limit (48 MiB on v7x, ~100 MiB on v5e/v6e)."""
    cap = None
    try:
        cap = pltpu.get_tpu_info().vmem_capacity_bytes
    except Exception:
        cap = None
    if cap is not None and cap >= 100 * 1024 * 1024:   # v5e / v6e: 128 MiB physical
        return 100 * 1024 * 1024
    return 48 * 1024 * 1024                            # v7x (64 MiB) or unknown


# ---------------------------------------------------------------------------
# Pallas kernel: full MLP forward on one row tile (weights VMEM-resident)
# ---------------------------------------------------------------------------
def _mlp_fused_kernel(x_ref, *refs):
    """refs = (w1, b1, w2, b2, ..., wL, bL, o_ref)."""
    o_ref = refs[-1]
    params = refs[:-1]
    n_layers = len(params) // 2

    h = x_ref[...]                                     # (TM, Kp) f32 row tile
    for layer in range(n_layers):
        w = params[2 * layer][...]                     # (Din_p, Dout_p) bf16
        b = params[2 * layer + 1][...]                 # (1, Dout_p) f32
        # bf16 MXU operands, f32 accumulation; bias/ReLU epilogue stays f32.
        y = jnp.dot(h.astype(jnp.bfloat16), w,
                    preferred_element_type=jnp.float32) + b
        if layer < n_layers - 1:
            y = jnp.maximum(y, 0.0)                    # ReLU (eval BN folded forward)
        h = y
    o_ref[...] = h.astype(o_ref.dtype)


# ---------------------------------------------------------------------------
# Wrapper: packing, BlockSpecs, single fused pallas_call
# ---------------------------------------------------------------------------
@functools.partial(jax.jit, static_argnames=("row_tile", "use_pipeline_modes"))
def _mlp_forward_impl(x, ws, bs, *, row_tile, use_pipeline_modes):
    N, K = x.shape
    out_channels = ws[-1].shape[1]

    # Lane-dense feature dims (multiples of 128).
    Kp = _round_up(K, 128)
    dout_ps = [_round_up(w.shape[1], 128) for w in ws]
    Op = dout_ps[-1]

    # Resident parameter footprint (bf16 weights + f32 biases).
    weight_bytes = 0
    din = Kp
    for dp in dout_ps:
        weight_bytes += din * dp * 2 + dp * 4
        din = dp
    wbuf = 1 if use_pipeline_modes else 2              # weight buffer count

    # Row tile: multiple of 16 (bf16 sublane packing), capped so the grid has
    # >= 2 tiles (v7x megacore), shrunk if the VMEM estimate exceeds budget.
    vmem_limit = _vmem_limit_bytes()
    TM = max(16, min(row_tile, _round_up(pl.cdiv(N, 2), 16)))
    max_feat = max([Kp] + dout_ps)

    def vmem_est(tm):
        tiles = 3 * tm * Kp * 4 + 2 * tm * Op * 4      # pipelined x / out tiles
        acts = 3 * tm * max_feat * 4                   # in-flight activations (rough)
        return tiles + acts + wbuf * weight_bytes

    while TM > 16 and vmem_est(TM) > int(0.6 * vmem_limit):
        TM = max(16, _round_up(TM // 2, 16))
    # TODO(synk): if the resident weights alone exceed VMEM (very wide hidden
    # layers), stream the largest weight over a second ("arbitrary") grid axis.

    grid = pl.cdiv(N, TM)

    # Feature-pad x (columns only). Rows are handled by the ragged final grid
    # tile: out-of-bounds rows are computed on garbage and masked on write.
    xp = jnp.pad(x, ((0, 0), (0, Kp - K)))

    x_kwargs = {}
    if use_pipeline_modes and grid >= 4:
        x_kwargs = dict(pipeline_mode=pl.Buffered(3))   # deeper input pipeline
    res_kwargs = {}
    if use_pipeline_modes:
        res_kwargs = dict(pipeline_mode=pl.Buffered(1))  # single-buffer constants

    in_specs = [pl.BlockSpec((TM, Kp), lambda i: (i, 0), **x_kwargs)]
    padded_params = []
    din = Kp
    for w, b, dp in zip(ws, bs, dout_ps):
        wp = jnp.pad(w, ((0, din - w.shape[0]), (0, dp - w.shape[1])))
        padded_params.append(wp.astype(jnp.bfloat16))            # bf16 MXU operand
        padded_params.append(
            jnp.pad(b, (0, dp - b.shape[0])).reshape(1, dp).astype(jnp.float32))
        in_specs.append(pl.BlockSpec((din, dp), lambda i: (0, 0), **res_kwargs))
        in_specs.append(pl.BlockSpec((1, dp), lambda i: (0, 0), **res_kwargs))
        din = dp

    dims = [K] + [w.shape[1] for w in ws]
    flops = 2 * N * sum(a * b_ for a, b_ in zip(dims[:-1], dims[1:]))
    bytes_accessed = N * Kp * 4 + N * Op * 4 + weight_bytes

    out_padded = pl.pallas_call(
        _mlp_fused_kernel,
        out_shape=jax.ShapeDtypeStruct((N, Op), jnp.float32),
        grid=(grid,),
        in_specs=in_specs,
        out_specs=pl.BlockSpec((TM, Op), lambda i: (i, 0)),
        compiler_params=pltpu.CompilerParams(
            dimension_semantics=("parallel",),          # megacore sharding on v7x
            vmem_limit_bytes=vmem_limit,
        ),
        cost_estimate=pl.CostEstimate(
            flops=int(flops), transcendentals=0,
            bytes_accessed=int(bytes_accessed)),
    )(xp, *padded_params)

    return out_padded[:, :out_channels]


def mlp_forward(x, ws, bs, *, row_tile=512):
    """x: (N, in_channels); ws/bs: BN-folded per-layer (in, out) weights, (out,) biases."""
    ws, bs = tuple(ws), tuple(bs)
    try:
        return _mlp_forward_impl(x, ws, bs, row_tile=row_tile,
                                 use_pipeline_modes=True)
    except Exception:
        # Fallback for runtimes without BlockSpec pipeline_mode support.
        return _mlp_forward_impl(x, ws, bs, row_tile=row_tile,
                                 use_pipeline_modes=False)


# ---------------------------------------------------------------------------
# Parameter construction (mimics PyTorch shapes) + exact eval-mode BN folding
# ---------------------------------------------------------------------------
def init_mlp_params(key, in_channels, hidden_channels, out_channels, num_layers):
    """lins: list of (w_t (in,out), b (out,));  bns: list of (gamma, beta, mean, var)."""
    dims = ([in_channels, out_channels] if num_layers == 1 else
            [in_channels] + [hidden_channels] * (num_layers - 1) + [out_channels])
    lins, bns = [], []
    for li in range(num_layers):
        fan_in, fan_out = dims[li], dims[li + 1]
        key, kw, kb = jax.random.split(key, 3)
        bound = 1.0 / jnp.sqrt(jnp.float32(fan_in))
        w_t = jax.random.uniform(kw, (fan_in, fan_out), jnp.float32,
                                 minval=-bound, maxval=bound)
        b = jax.random.uniform(kb, (fan_out,), jnp.float32,
                               minval=-bound, maxval=bound)
        lins.append((w_t, b))
        if li < num_layers - 1:
            # Non-trivial BN stats so the folding path is actually exercised.
            key, kg, kbt, km, kv = jax.random.split(key, 5)
            gamma = 1.0 + 0.1 * jax.random.normal(kg, (fan_out,), jnp.float32)
            beta = 0.1 * jax.random.normal(kbt, (fan_out,), jnp.float32)
            run_mean = 0.1 * jax.random.normal(km, (fan_out,), jnp.float32)
            run_var = jnp.abs(1.0 + 0.1 * jax.random.normal(kv, (fan_out,), jnp.float32))
            bns.append((gamma, beta, run_mean, run_var))
    return lins, bns


def fold_bn_eval(lins, bns, eps=1e-5):
    """Fold eval-mode BN of layer i into the linear of layer i+1 (mathematically exact):
       (r*scale + shift) @ W + b  ==  r @ (scale[:,None]*W) + (shift @ W + b)."""
    ws, bs = [lins[0][0]], [lins[0][1]]
    for i in range(len(bns)):
        gamma, beta, mean, var = bns[i]
        scale = gamma / jnp.sqrt(var + eps)
        shift = beta - mean * scale
        w_next, b_next = lins[i + 1]
        ws.append(scale[:, None] * w_next)
        bs.append(shift @ w_next + b_next)
    return ws, bs


# ---------------------------------------------------------------------------
# Pure-JAX reference (un-folded, follows the PyTorch module op order exactly)
# ---------------------------------------------------------------------------
def mlp_forward_ref(x, lins, bns, eps=1e-5):
    h = x
    for i in range(len(lins) - 1):
        w, b = lins[i]
        h = jnp.maximum(h @ w + b, 0.0)                      # Linear -> ReLU
        gamma, beta, mean, var = bns[i]
        h = (h - mean) / jnp.sqrt(var + eps) * gamma + beta  # BatchNorm1d (eval)
        # dropout: identity in eval mode
    w, b = lins[-1]
    return h @ w + b


# ---------------------------------------------------------------------------
if __name__ == "__main__":
    # Small, non-aligned shapes: exercises 128-lane feature padding, a >=2-tile
    # grid (megacore path), and a ragged (masked) final row tile.
    N = 300
    in_channels, hidden_channels, out_channels = 50, 64, 8
    num_layers = 3

    key = jax.random.PRNGKey(0)
    key, kx, kp = jax.random.split(key, 3)
    x = jax.random.normal(kx, (N, in_channels), jnp.float32)
    lins, bns = init_mlp_params(kp, in_channels, hidden_channels,
                                out_channels, num_layers)

    ws, bs = fold_bn_eval(lins, bns)

    out = mlp_forward(x, ws, bs)              # TM=160 -> grid=(2,), last tile ragged
    out = jax.block_until_ready(out)

    ref = mlp_forward_ref(x, lins, bns)
    assert out.shape == (N, out_channels), out.shape
    # bf16 MXU operands with f32 accumulation -> loosened tolerance vs f32 reference.
    max_err = float(jnp.max(jnp.abs(out - ref)))
    assert jnp.allclose(out, ref, atol=5e-2, rtol=5e-2), max_err

    print("KERNEL_OK")
</pallas_src>

<mosaic_0001>
module attributes {stable_mosaic.version = 11 : i64} {
  func.func @_mlp_fused_kernel(%arg0: i32, %arg1: memref<160x128xf32, #tpu.memory_space<vmem>>, %arg2: memref<128x128xbf16, #tpu.memory_space<vmem>>, %arg3: memref<1x128xf32, #tpu.memory_space<vmem>>, %arg4: memref<128x128xbf16, #tpu.memory_space<vmem>>, %arg5: memref<1x128xf32, #tpu.memory_space<vmem>>, %arg6: memref<128x128xbf16, #tpu.memory_space<vmem>>, %arg7: memref<1x128xf32, #tpu.memory_space<vmem>>, %arg8: memref<160x128xf32, #tpu.memory_space<vmem>>) attributes {dimension_semantics = [#tpu.dimension_semantics<parallel>], iteration_bounds = array<i64: 2>, scalar_prefetch = 0 : i64, scratch_operands = 0 : i64, tpu.core_type = #tpu.core_type<tc>, window_params = [{transform_indices = @transform_0, window_bounds = array<i64: 160, 128>}, {pipeline_mode = #tpu.pipeline_mode<synchronous>, transform_indices = @transform_1, window_bounds = array<i64: 128, 128>}, {pipeline_mode = #tpu.pipeline_mode<synchronous>, transform_indices = @transform_2, window_bounds = array<i64: 1, 128>}, {pipeline_mode = #tpu.pipeline_mode<synchronous>, transform_indices = @transform_3, window_bounds = array<i64: 128, 128>}, {pipeline_mode = #tpu.pipeline_mode<synchronous>, transform_indices = @transform_4, window_bounds = array<i64: 1, 128>}, {pipeline_mode = #tpu.pipeline_mode<synchronous>, transform_indices = @transform_5, window_bounds = array<i64: 128, 128>}, {pipeline_mode = #tpu.pipeline_mode<synchronous>, transform_indices = @transform_6, window_bounds = array<i64: 1, 128>}, {transform_indices = @transform_7, window_bounds = array<i64: 160, 128>}]} {
    %c0 = arith.constant 0 : index
    %c0_0 = arith.constant 0 : index
    %0 = vector.load %arg1[%c0, %c0_0] : memref<160x128xf32, #tpu.memory_space<vmem>>, vector<160x128xf32>
    %c0_1 = arith.constant 0 : index
    %c0_2 = arith.constant 0 : index
    %1 = vector.load %arg2[%c0_1, %c0_2] : memref<128x128xbf16, #tpu.memory_space<vmem>>, vector<128x128xbf16>
    %c0_3 = arith.constant 0 : index
    %c0_4 = arith.constant 0 : index
    %2 = vector.load %arg3[%c0_3, %c0_4] : memref<1x128xf32, #tpu.memory_space<vmem>>, vector<1x128xf32>
    %3 = arith.truncf %0 : vector<160x128xf32> to vector<160x128xbf16>
    %cst = arith.constant dense<0.000000e+00> : vector<160x128xf32>
    %4 = tpu.matmul %3, %1, %cst {dimension_numbers = #tpu.dot_dimension_numbers<[1], [0], [0], [1], [0, 0, 1, 1], [], []>} : vector<160x128xbf16>, vector<128x128xbf16>, vector<160x128xf32> -> vector<160x128xf32>
    %5 = vector.broadcast %2 : vector<1x128xf32> to vector<160x128xf32>
    %6 = arith.addf %4, %5 : vector<160x128xf32>
    %cst_5 = arith.constant 0.000000e+00 : f32
    %7 = vector.broadcast %cst_5 : f32 to vector<160x128xf32>
    %8 = arith.maximumf %6, %7 : vector<160x128xf32>
    %c0_6 = arith.constant 0 : index
    %c0_7 = arith.constant 0 : index
    %9 = vector.load %arg4[%c0_6, %c0_7] : memref<128x128xbf16, #tpu.memory_space<vmem>>, vector<128x128xbf16>
    %c0_8 = arith.constant 0 : index
    %c0_9 = arith.constant 0 : index
    %10 = vector.load %arg5[%c0_8, %c0_9] : memref<1x128xf32, #tpu.memory_space<vmem>>, vector<1x128xf32>
    %11 = arith.truncf %8 : vector<160x128xf32> to vector<160x128xbf16>
    %cst_10 = arith.constant dense<0.000000e+00> : vector<160x128xf32>
    %12 = tpu.matmul %11, %9, %cst_10 {dimension_numbers = #tpu.dot_dimension_numbers<[1], [0], [0], [1], [0, 0, 1, 1], [], []>} : vector<160x128xbf16>, vector<128x128xbf16>, vector<160x128xf32> -> vector<160x128xf32>
    %13 = vector.broadcast %10 : vector<1x128xf32> to vector<160x128xf32>
    %14 = arith.addf %12, %13 : vector<160x128xf32>
    %cst_11 = arith.constant 0.000000e+00 : f32
    %15 = vector.broadcast %cst_11 : f32 to vector<160x128xf32>
    %16 = arith.maximumf %14, %15 : vector<160x128xf32>
    %c0_12 = arith.constant 0 : index
    %c0_13 = arith.constant 0 : index
    %17 = vector.load %arg6[%c0_12, %c0_13] : memref<128x128xbf16, #tpu.memory_space<vmem>>, vector<128x128xbf16>
    %c0_14 = arith.constant 0 : index
    %c0_15 = arith.constant 0 : index
    %18 = vector.load %arg7[%c0_14, %c0_15] : memref<1x128xf32, #tpu.memory_space<vmem>>, vector<1x128xf32>
    %19 = arith.truncf %16 : vector<160x128xf32> to vector<160x128xbf16>
    %cst_16 = arith.constant dense<0.000000e+00> : vector<160x128xf32>
    %20 = tpu.matmul %19, %17, %cst_16 {dimension_numbers = #tpu.dot_dimension_numbers<[1], [0], [0], [1], [0, 0, 1, 1], [], []>} : vector<160x128xbf16>, vector<128x128xbf16>, vector<160x128xf32> -> vector<160x128xf32>
    %21 = vector.broadcast %18 : vector<1x128xf32> to vector<160x128xf32>
    %22 = arith.addf %20, %21 : vector<160x128xf32>
    %c0_17 = arith.constant 0 : index
    %c0_18 = arith.constant 0 : index
    %23 = vector.load %arg8[%c0_17, %c0_18] : memref<160x128xf32, #tpu.memory_space<vmem>>, vector<160x128xf32>
    tpu.vector_store %arg8[%c0_17, %c0_18], %22 {strides = array<i32>} : memref<160x128xf32, #tpu.memory_space<vmem>>, vector<160x128xf32>,
    return
  }
  func.func @transform_0(%arg0: i32) -> (i32, i32) {
    %c0_i32 = arith.constant 0 : i32
    %c0_i32_0 = arith.constant 0 : i32
    return %arg0, %c0_i32 : i32, i32
  }
  func.func @transform_1(%arg0: i32) -> (i32, i32) {
    %c0_i32 = arith.constant 0 : i32
    %c0_i32_0 = arith.constant 0 : i32
    %c0_i32_1 = arith.constant 0 : i32
    return %c0_i32, %c0_i32_0 : i32, i32
  }
  func.func @transform_2(%arg0: i32) -> (i32, i32) {
    %c0_i32 = arith.constant 0 : i32
    %c0_i32_0 = arith.constant 0 : i32
    %c0_i32_1 = arith.constant 0 : i32
    return %c0_i32, %c0_i32_0 : i32, i32
  }
  func.func @transform_3(%arg0: i32) -> (i32, i32) {
    %c0_i32 = arith.constant 0 : i32
    %c0_i32_0 = arith.constant 0 : i32
    %c0_i32_1 = arith.constant 0 : i32
    return %c0_i32, %c0_i32_0 : i32, i32
  }
  func.func @transform_4(%arg0: i32) -> (i32, i32) {
    %c0_i32 = arith.constant 0 : i32
    %c0_i32_0 = arith.constant 0 : i32
    %c0_i32_1 = arith.constant 0 : i32
    return %c0_i32, %c0_i32_0 : i32, i32
  }
  func.func @transform_5(%arg0: i32) -> (i32, i32) {
    %c0_i32 = arith.constant 0 : i32
    %c0_i32_0 = arith.constant 0 : i32
    %c0_i32_1 = arith.constant 0 : i32
    return %c0_i32, %c0_i32_0 : i32, i32
  }
  func.func @transform_6(%arg0: i32) -> (i32, i32) {
    %c0_i32 = arith.constant 0 : i32
    %c0_i32_0 = arith.constant 0 : i32
    %c0_i32_1 = arith.constant 0 : i32
    return %c0_i32, %c0_i32_0 : i32, i32
  }
  func.func @transform_7(%arg0: i32) -> (i32, i32) {
    %c0_i32 = arith.constant 0 : i32
    %c0_i32_0 = arith.constant 0 : i32
    return %arg0, %c0_i32 : i32, i32
  }
}

module attributes {stable_mosaic.version = 11 : i64} {
  func.func @_mlp_fused_kernel(%arg0: i32, %arg1: memref<160x128xf32, #tpu.memory_space<vmem>>, %arg2: memref<128x128xbf16, #tpu.memory_space<vmem>>, %arg3: memref<1x128xf32, #tpu.memory_space<vmem>>, %arg4: memref<128x128xbf16, #tpu.memory_space<vmem>>, %arg5: memref<1x128xf32, #tpu.memory_space<vmem>>, %arg6: memref<128x128xbf16, #tpu.memory_space<vmem>>, %arg7: memref<1x128xf32, #tpu.memory_space<vmem>>, %arg8: memref<160x128xf32, #tpu.memory_space<vmem>>) attributes {dimension_semantics = [#tpu.dimension_semantics<parallel>], iteration_bounds = array<i64: 2>, scalar_prefetch = 0 : i64, scratch_operands = 0 : i64, tpu.core_type = #tpu.core_type<tc>, window_params = [{transform_indices = @transform_0, window_bounds = array<i64: 160, 128>}, {pipeline_mode = #tpu.pipeline_mode<synchronous>, transform_indices = @transform_1, window_bounds = array<i64: 128, 128>}, {pipeline_mode = #tpu.pipeline_mode<synchronous>, transform_indices = @transform_2, window_bounds = array<i64: 1, 128>}, {pipeline_mode = #tpu.pipeline_mode<synchronous>, transform_indices = @transform_3, window_bounds = array<i64: 128, 128>}, {pipeline_mode = #tpu.pipeline_mode<synchronous>, transform_indices = @transform_4, window_bounds = array<i64: 1, 128>}, {pipeline_mode = #tpu.pipeline_mode<synchronous>, transform_indices = @transform_5, window_bounds = array<i64: 128, 128>}, {pipeline_mode = #tpu.pipeline_mode<synchronous>, transform_indices = @transform_6, window_bounds = array<i64: 1, 128>}, {transform_indices = @transform_7, window_bounds = array<i64: 160, 128>}]} {
    %c0 = arith.constant 0 : index
    %c0_0 = arith.constant 0 : index
    %0 = vector.load %arg1[%c0, %c0_0] : memref<160x128xf32, #tpu.memory_space<vmem>>, vector<160x128xf32>
    %c0_1 = arith.constant 0 : index
    %c0_2 = arith.constant 0 : index
    %1 = vector.load %arg2[%c0_1, %c0_2] : memref<128x128xbf16, #tpu.memory_space<vmem>>, vector<128x128xbf16>
    %c0_3 = arith.constant 0 : index
    %c0_4 = arith.constant 0 : index
    %2 = vector.load %arg3[%c0_3, %c0_4] : memref<1x128xf32, #tpu.memory_space<vmem>>, vector<1x128xf32>
    %3 = arith.truncf %0 : vector<160x128xf32> to vector<160x128xbf16>
    %cst = arith.constant dense<0.000000e+00> : vector<160x128xf32>
    %4 = tpu.matmul %3, %1, %cst {dimension_numbers = #tpu.dot_dimension_numbers<[1], [0], [0], [1], [0, 0, 1, 1], [], []>} : vector<160x128xbf16>, vector<128x128xbf16>, vector<160x128xf32> -> vector<160x128xf32>
    %5 = vector.broadcast %2 : vector<1x128xf32> to vector<160x128xf32>
    %6 = arith.addf %4, %5 : vector<160x128xf32>
    %cst_5 = arith.constant 0.000000e+00 : f32
    %7 = vector.broadcast %cst_5 : f32 to vector<160x128xf32>
    %8 = arith.maximumf %6, %7 : vector<160x128xf32>
    %c0_6 = arith.constant 0 : index
    %c0_7 = arith.constant 0 : index
    %9 = vector.load %arg4[%c0_6, %c0_7] : memref<128x128xbf16, #tpu.memory_space<vmem>>, vector<128x128xbf16>
    %c0_8 = arith.constant 0 : index
    %c0_9 = arith.constant 0 : index
    %10 = vector.load %arg5[%c0_8, %c0_9] : memref<1x128xf32, #tpu.memory_space<vmem>>, vector<1x128xf32>
    %11 = arith.truncf %8 : vector<160x128xf32> to vector<160x128xbf16>
    %cst_10 = arith.constant dense<0.000000e+00> : vector<160x128xf32>
    %12 = tpu.matmul %11, %9, %cst_10 {dimension_numbers = #tpu.dot_dimension_numbers<[1], [0], [0], [1], [0, 0, 1, 1], [], []>} : vector<160x128xbf16>, vector<128x128xbf16>, vector<160x128xf32> -> vector<160x128xf32>
    %13 = vector.broadcast %10 : vector<1x128xf32> to vector<160x128xf32>
    %14 = arith.addf %12, %13 : vector<160x128xf32>
    %cst_11 = arith.constant 0.000000e+00 : f32
    %15 = vector.broadcast %cst_11 : f32 to vector<160x128xf32>
    %16 = arith.maximumf %14, %15 : vector<160x128xf32>
    %c0_12 = arith.constant 0 : index
    %c0_13 = arith.constant 0 : index
    %17 = vector.load %arg6[%c0_12, %c0_13] : memref<128x128xbf16, #tpu.memory_space<vmem>>, vector<128x128xbf16>
    %c0_14 = arith.constant 0 : index
    %c0_15 = arith.constant 0 : index
    %18 = vector.load %arg7[%c0_14, %c0_15] : memref<1x128xf32, #tpu.memory_space<vmem>>, vector<1x128xf32>
    %19 = arith.truncf %16 : vector<160x128xf32> to vector<160x128xbf16>
    %cst_16 = arith.constant dense<0.000000e+00> : vector<160x128xf32>
    %20 = tpu.matmul %19, %17, %cst_16 {dimension_numbers = #tpu.dot_dimension_numbers<[1], [0], [0], [1], [0, 0, 1, 1], [], []>} : vector<160x128xbf16>, vector<128x128xbf16>, vector<160x128xf32> -> vector<160x128xf32>
    %21 = vector.broadcast %18 : vector<1x128xf32> to vector<160x128xf32>
    %22 = arith.addf %20, %21 : vector<160x128xf32>
    %c0_17 = arith.constant 0 : index
    %c0_18 = arith.constant 0 : index
    %23 = vector.load %arg8[%c0_17, %c0_18] : memref<160x128xf32, #tpu.memory_space<vmem>>, vector<160x128xf32>
    tpu.vector_store %arg8[%c0_17, %c0_18], %22 {strides = array<i32>} : memref<160x128xf32, #tpu.memory_space<vmem>>, vector<160x128xf32>,
    return
  }
  func.func @transform_0(%arg0: i32) -> (i32, i32) {
    %c0_i32 = arith.constant 0 : i32
    %c0_i32_0 = arith.constant 0 : i32
    return %arg0, %c0_i32 : i32, i32
  }
  func.func @transform_1(%arg0: i32) -> (i32, i32) {
    %c0_i32 = arith.constant 0 : i32
    %c0_i32_0 = arith.constant 0 : i32
    %c0_i32_1 = arith.constant 0 : i32
    return %c0_i32, %c0_i32_0 : i32, i32
  }
  func.func @transform_2(%arg0: i32) -> (i32, i32) {
    %c0_i32 = arith.constant 0 : i32
    %c0_i32_0 = arith.constant 0 : i32
    %c0_i32_1 = arith.constant 0 : i32
    return %c0_i32, %c0_i32_0 : i32, i32
  }
  func.func @transform_3(%arg0: i32) -> (i32, i32) {
    %c0_i32 = arith.constant 0 : i32
    %c0_i32_0 = arith.constant 0 : i32
    %c0_i32_1 = arith.constant 0 : i32
    return %c0_i32, %c0_i32_0 : i32, i32
  }
  func.func @transform_4(%arg0: i32) -> (i32, i32) {
    %c0_i32 = arith.constant 0 : i32
    %c0_i32_0 = arith.constant 0 : i32
    %c0_i32_1 = arith.constant 0 : i32
    return %c0_i32, %c0_i32_0 : i32, i32
  }
  func.func @transform_5(%arg0: i32) -> (i32, i32) {
    %c0_i32 = arith.constant 0 : i32
    %c0_i32_0 = arith.constant 0 : i32
    %c0_i32_1 = arith.constant 0 : i32
    return %c0_i32, %c0_i32_0 : i32, i32
  }
  func.func @transform_6(%arg0: i32) -> (i32, i32) {
    %c0_i32 = arith.constant 0 : i32
    %c0_i32_0 = arith.constant 0 : i32
    %c0_i32_1 = arith.constant 0 : i32
    return %c0_i32, %c0_i32_0 : i32, i32
  }
  func.func @transform_7(%arg0: i32) -> (i32, i32) {
    %c0_i32 = arith.constant 0 : i32
    %c0_i32_0 = arith.constant 0 : i32
    return %arg0, %c0_i32 : i32, i32
  }
}

</mosaic_0001>

<llo_original>
// kernel: _mlp_forward_impl.1
$region0: #{_mlp_forward_impl.1}
  #allocation0 [shape = 'u32[]', space=smem, size = 0x4, offset = 0x4, fixed_abs, tag = 'smem constant byte address 0x4 - core index']
  #allocation1 [shape = 'u32[72,128]{1,0:T(1,128)}', space=vmem, size = 0x9000, scoped, tag = 'internal scratch']
  %s0 = inlined_call_operand.vmem [shape: f32[300,128], index: 0, kind: input, shape index: {}]
  %s1 = inlined_call_operand.vmem [shape: bf16[128,128], index: 1, kind: input, shape index: {}]
  %s2 = inlined_call_operand.vmem [shape: f32[1,128], index: 2, kind: input, shape index: {}]
  %s3 = inlined_call_operand.vmem [shape: bf16[128,128], index: 3, kind: input, shape index: {}]
  %s4 = inlined_call_operand.vmem [shape: f32[1,128], index: 4, kind: input, shape index: {}]
  %s5 = inlined_call_operand.vmem [shape: bf16[128,128], index: 5, kind: input, shape index: {}]
  %s6 = inlined_call_operand.vmem [shape: f32[1,128], index: 6, kind: input, shape index: {}]
  %s7 = inlined_call_operand.vmem [shape: f32[300,128], index: 7, kind: output, shape index: {}]
  %s8 = sld [smem:[#allocation0]]
  $region109: #{_mlp_forward_impl.1} parent=0
    _
  %s10 = ssub.s32 1, %s8
  %s11 = scalar_select 0, %s10, %s8
  $region1: #{_mlp_forward_impl.1} parent=0
    #allocation2 [shape = 'u8[163840]{0}', space=vmem, size = 0x28000, scoped, tag = 'output window, operand 0']
    loop: start=0, step=1, limit=4
    $region2: #{_mlp_forward_impl.1} parent=1 // loop_pre_header
      _
    $region3: #{_mlp_forward_impl.1} parent=1 // loop_header
      %s13 = sphi 0, %s17
      %p14 = scmp.ge.s32.totalorder %s13, 4
      %s23 = sphi 0, %s25
      %s26 = sphi 0, %s23
      %s27 = sphi 0, %s26
      %s43 = sphi 0, %s27
      %s47 = sphi 0, %s47
      %s49 = sphi 0, %s47
      %s50 = sphi 0, %s49
      %s64 = sphi 0, %s50
      %s68 = sphi 0, %s68
      %s70 = sphi 0, %s68
      %s71 = sphi 0, %s70
      %s85 = sphi 0, %s71
      %s89 = sphi 0, %s89
      %s91 = sphi 0, %s89
      %s92 = sphi 0, %s91
      %s106 = sphi 0, %s92
      %s110 = sphi 0, %s110
      %s112 = sphi 0, %s110
      %s113 = sphi 0, %s112
      %s127 = sphi 0, %s113
      %s131 = sphi 0, %s131
      %s133 = sphi 0, %s131
      %s134 = sphi 0, %s133
      %s148 = sphi 0, %s134
      %s152 = sphi 0, %s152
      %s154 = sphi 0, %s152
      %s155 = sphi 0, %s154
      %s169 = sphi 0, %s155
      %s175 = sphi 0, %s177
      %s178 = sphi 0, %s175
      %s179 = sphi 0, %s178
      %s195 = sphi 0, %s179
    $region4: #{_mlp_forward_impl.1} parent=1 // loop_header_branch
      %16 = sbr.rel (%p14) target = $region8
    $region5: #{_mlp_forward_impl.1} parent=1 // loop_body
      %s18 = ssub.s32 %s13, 1
      %s19 = ssub.s32 %s13, 2
      %s20 = sadd.s32 %s13, 1
      %s21 = ssub.s32 %s13, %s20
      %p22 = scmp.eq.s32.totalorder %s21, 0
      %s24 = sadd.s32 %s23, 1
      %s25 = scalar_select %p22, %s23, %s24
      %p28 = pneg %p22
      %p29 = scmp.eq.s32.totalorder %s13, 1
      %p30 = por %p28, %p29
      %p31 = scmp.ne.s32.totalorder %s23, %s26
      %p32 = scmp.eq.s32.totalorder %s13, 0
      %p33 = por %p31, %p32
      %p34 = scmp.ne.s32.totalorder %s23, %s26
      %p35 = scmp.eq.s32.totalorder %s18, 1
      %p36 = por %p34, %p35
      %p37 = scmp.ne.s32.totalorder %s26, %s27
      %p38 = scmp.eq.s32.totalorder %s18, 0
      %p39 = por %p37, %p38
      %p40 = scmp.ne.s32.totalorder %s26, %s27
      %p41 = scmp.eq.s32.totalorder %s19, 1
      %p42 = por %p40, %p41
      %p44 = scmp.ne.s32.totalorder %s27, %s43
      %p45 = scmp.eq.s32.totalorder %s19, 0
      %p46 = por %p44, %p45
      %s48 = sadd.s32 %s47, 1
      %p51 = scmp.eq.s32.totalorder %s13, 1
      %p52 = scmp.ne.s32.totalorder %s47, %s49
      %p53 = scmp.eq.s32.totalorder %s13, 0
      %p54 = por %p52, %p53
      %p55 = scmp.ne.s32.totalorder %s47, %s49
      %p56 = scmp.eq.s32.totalorder %s18, 1
      %p57 = por %p55, %p56
      %p58 = scmp.ne.s32.totalorder %s49, %s50
      %p59 = scmp.eq.s32.totalorder %s18, 0
      %p60 = por %p58, %p59
      %p61 = scmp.ne.s32.totalorder %s49, %s50
      %p62 = scmp.eq.s32.totalorder %s19, 1
      %p63 = por %p61, %p62
      %p65 = scmp.ne.s32.totalorder %s50, %s64
      %p66 = scmp.eq.s32.totalorder %s19, 0
      %p67 = por %p65, %p66
      %s69 = sadd.s32 %s68, 1
      %p72 = scmp.eq.s32.totalorder %s13, 1
      %p73 = scmp.ne.s32.totalorder %s68, %s70
      %p74 = scmp.eq.s32.totalorder %s13, 0
      %p75 = por %p73, %p74
      %p76 = scmp.ne.s32.totalorder %s68, %s70
      %p77 = scmp.eq.s32.totalorder %s18, 1
      %p78 = por %p76, %p77
      %p79 = scmp.ne.s32.totalorder %s70, %s71
      %p80 = scmp.eq.s32.totalorder %s18, 0
      %p81 = por %p79, %p80
      %p82 = scmp.ne.s32.totalorder %s70, %s71
      %p83 = scmp.eq.s32.totalorder %s19, 1
      %p84 = por %p82, %p83
      %p86 = scmp.ne.s32.totalorder %s71, %s85
      %p87 = scmp.eq.s32.totalorder %s19, 0
      %p88 = por %p86, %p87
      %s90 = sadd.s32 %s89, 1
      %p93 = scmp.eq.s32.totalorder %s13, 1
      %p94 = scmp.ne.s32.totalorder %s89, %s91
      %p95 = scmp.eq.s32.totalorder %s13, 0
      %p96 = por %p94, %p95
      %p97 = scmp.ne.s32.totalorder %s89, %s91
      %p98 = scmp.eq.s32.totalorder %s18, 1
      %p99 = por %p97, %p98
      %p100 = scmp.ne.s32.totalorder %s91, %s92
      %p101 = scmp.eq.s32.totalorder %s18, 0
      %p102 = por %p100, %p101
      %p103 = scmp.ne.s32.totalorder %s91, %s92
      %p104 = scmp.eq.s32.totalorder %s19, 1
      %p105 = por %p103, %p104
      %p107 = scmp.ne.s32.totalorder %s92, %s106
      %p108 = scmp.eq.s32.totalorder %s19, 0
      %p109 = por %p107, %p108
      %s111 = sadd.s32 %s110, 1
      %p114 = scmp.eq.s32.totalorder %s13, 1
      %p115 = scmp.ne.s32.totalorder %s110, %s112
      %p116 = scmp.eq.s32.totalorder %s13, 0
      %p117 = por %p115, %p116
      %p118 = scmp.ne.s32.totalorder %s110, %s112
      %p119 = scmp.eq.s32.totalorder %s18, 1
      %p120 = por %p118, %p119
      %p121 = scmp.ne.s32.totalorder %s112, %s113
      %p122 = scmp.eq.s32.totalorder %s18, 0
      %p123 = por %p121, %p122
      %p124 = scmp.ne.s32.totalorder %s112, %s113
      %p125 = scmp.eq.s32.totalorder %s19, 1
      %p126 = por %p124, %p125
      %p128 = scmp.ne.s32.totalorder %s113, %s127
      %p129 = scmp.eq.s32.totalorder %s19, 0
      %p130 = por %p128, %p129
      %s132 = sadd.s32 %s131, 1
      %p135 = scmp.eq.s32.totalorder %s13, 1
      %p136 = scmp.ne.s32.totalorder %s131, %s133
      %p137 = scmp.eq.s32.totalorder %s13, 0
      %p138 = por %p136, %p137
      %p139 = scmp.ne.s32.totalorder %s131, %s133
      %p140 = scmp.eq.s32.totalorder %s18, 1
      %p141 = por %p139, %p140
      %p142 = scmp.ne.s32.totalorder %s133, %s134
      %p143 = scmp.eq.s32.totalorder %s18, 0
      %p144 = por %p142, %p143
      %p145 = scmp.ne.s32.totalorder %s133, %s134
      %p146 = scmp.eq.s32.totalorder %s19, 1
      %p147 = por %p145, %p146
      %p149 = scmp.ne.s32.totalorder %s134, %s148
      %p150 = scmp.eq.s32.totalorder %s19, 0
      %p151 = por %p149, %p150
      %s153 = sadd.s32 %s152, 1
      %p156 = scmp.eq.s32.totalorder %s13, 1
      %p157 = scmp.ne.s32.totalorder %s152, %s154
      %p158 = scmp.eq.s32.totalorder %s13, 0
      %p159 = por %p157, %p158
      %p160 = scmp.ne.s32.totalorder %s152, %s154
      %p161 = scmp.eq.s32.totalorder %s18, 1
      %p162 = por %p160, %p161
      %p163 = scmp.ne.s32.totalorder %s154, %s155
      %p164 = scmp.eq.s32.totalorder %s18, 0
      %p165 = por %p163, %p164
      %p166 = scmp.ne.s32.totalorder %s154, %s155
      %p167 = scmp.eq.s32.totalorder %s19, 1
      %p168 = por %p166, %p167
      %p170 = scmp.ne.s32.totalorder %s155, %s169
      %p171 = scmp.eq.s32.totalorder %s19, 0
      %p172 = por %p170, %p171
      %s173 = ssub.s32 %s13, %s20
      %p174 = scmp.eq.s32.totalorder %s173, 0
      %s176 = sadd.s32 %s175, 1
      %s177 = scalar_select %p174, %s175, %s176
      %p180 = pneg %p174
      %p181 = scmp.eq.s32.totalorder %s13, 1
      %p182 = por %p180, %p181
      %p183 = scmp.ne.s32.totalorder %s175, %s178
      %p184 = scmp.eq.s32.totalorder %s13, 0
      %p185 = por %p183, %p184
      %p186 = scmp.ne.s32.totalorder %s175, %s178
      %p187 = scmp.eq.s32.totalorder %s18, 1
      %p188 = por %p186, %p187
      %p189 = scmp.ne.s32.totalorder %s178, %s179
      %p190 = scmp.eq.s32.totalorder %s18, 0
      %p191 = por %p189, %p190
      %p192 = scmp.ne.s32.totalorder %s178, %s179
      %p193 = scmp.eq.s32.totalorder %s19, 1
      %p194 = por %p192, %p193
      %p196 = scmp.ne.s32.totalorder %s179, %s195
      %p197 = scmp.eq.s32.totalorder %s19, 0
      %p198 = por %p196, %p197
      %p199 = scmp.le.s32.totalorder 1, %s13
      %p200 = scmp.lt.s32.totalorder %s13, 3
      %p201 = pnand %p199, %p200
      %p202 = pneg %p201
      // Predicated region
      $region9: #{_mlp_forward_impl.1} parent=5 // pred_check
        _
      $region10: #{_mlp_forward_impl.1} parent=5 // pred_check_branch
        %204 = sbr.rel (%p201) target = $region12
      $region11: #{_mlp_forward_impl.1} parent=5 // pred_region
        %s205 = ssub.s32 %s13, 1
        // Predicated region
        $region13: #{_mlp_forward_impl.1} parent=11 // pred_check
          %p206 = pneg %p60
        $region14: #{_mlp_forward_impl.1} parent=11 // pred_check_branch
          %208 = sbr.rel (%p206) target = $region16
        $region15: #{_mlp_forward_impl.1} parent=11 // pred_region
          _
        $region16: #{_mlp_forward_impl.1} parent=11 // pred_fallthru
          _
        // Predicated region
        $region17: #{_mlp_forward_impl.1} parent=11 // pred_check
          %p209 = pneg %p81
        $region18: #{_mlp_forward_impl.1} parent=11 // pred_check_branch
          %211 = sbr.rel (%p209) target = $region20
        $region19: #{_mlp_forward_impl.1} parent=11 // pred_region
          _
        $region20: #{_mlp_forward_impl.1} parent=11 // pred_fallthru
          _
        // Predicated region
        $region21: #{_mlp_forward_impl.1} parent=11 // pred_check
          %p212 = pneg %p102
        $region22: #{_mlp_forward_impl.1} parent=11 // pred_check_branch
          %214 = sbr.rel (%p212) target = $region24
        $region23: #{_mlp_forward_impl.1} parent=11 // pred_region
          _
        $region24: #{_mlp_forward_impl.1} parent=11 // pred_fallthru
          _
        // Predicated region
        $region25: #{_mlp_forward_impl.1} parent=11 // pred_check
          %p215 = pneg %p123
        $region26: #{_mlp_forward_impl.1} parent=11 // pred_check_branch
          %217 = sbr.rel (%p215) target = $region28
        $region27: #{_mlp_forward_impl.1} parent=11 // pred_region
          _
        $region28: #{_mlp_forward_impl.1} parent=11 // pred_fallthru
          _
        // Predicated region
        $region29: #{_mlp_forward_impl.1} parent=11 // pred_check
          %p218 = pneg %p144
        $region30: #{_mlp_forward_impl.1} parent=11 // pred_check_branch
          %220 = sbr.rel (%p218) target = $region32
        $region31: #{_mlp_forward_impl.1} parent=11 // pred_region
          _
        $region32: #{_mlp_forward_impl.1} parent=11 // pred_fallthru
          _
        // Predicated region
        $region33: #{_mlp_forward_impl.1} parent=11 // pred_check
          %p221 = pneg %p165
        $region34: #{_mlp_forward_impl.1} parent=11 // pred_check_branch
          %223 = sbr.rel (%p221) target = $region36
        $region35: #{_mlp_forward_impl.1} parent=11 // pred_region
          _
        $region36: #{_mlp_forward_impl.1} parent=11 // pred_fallthru
          _
      $region12: #{_mlp_forward_impl.1} parent=5 // pred_fallthru
        _
      %p224 = scmp.lt.s32.totalorder %s13, 2
      // Predicated region
      $region37: #{_mlp_forward_impl.1} parent=5 // pred_check
        %p225 = pneg %p224
      $region38: #{_mlp_forward_impl.1} parent=5 // pred_check_branch
        %227 = sbr.rel (%p225) target = $region40
      $region39: #{_mlp_forward_impl.1} parent=5 // pred_region
        // Predicated region
        $region41: #{_mlp_forward_impl.1} parent=39 // pred_check
          %p228 = pneg %p33
        $region42: #{_mlp_forward_impl.1} parent=39 // pred_check_branch
          %230 = sbr.rel (%p228) target = $region44
        $region43: #{_mlp_forward_impl.1} parent=39 // pred_region
          %s231 = smul.u32 20, %s13
          %s232 = ssub.s32 38, %s231
          %p233 = scmp.lt.s32.totalorder %s232, 20
          %s234 = scalar_select %p233, %s232, 20
          %s235 = smul.u32 8, %s234
          %p236 = scmp.lt.s32.totalorder %s231, 37
          %s237 = scalar_select %p236, %s231, 37
          %s238 = smul.addr %s237, 8
          %s239 = scalar_lea.vmem %s0, %s238
          %s240 = smul.u32 20, %s13
          %s241 = ssub.s32 38, %s240
          %p242 = scmp.lt.s32.totalorder %s241, 20
          %s243 = scalar_select %p242, %s241, 20
          %s244 = smul.u32 8, %s243
        $region44: #{_mlp_forward_impl.1} parent=39 // pred_fallthru
          _
      $region40: #{_mlp_forward_impl.1} parent=5 // pred_fallthru
        _
      %p245 = scmp.le.s32.totalorder 1, %s13
      %p246 = scmp.lt.s32.totalorder %s13, 3
      %p247 = pnand %p245, %p246
      %p248 = pneg %p247
      // Predicated region
      $region45: #{_mlp_forward_impl.1} parent=5 // pred_check
        _
      $region46: #{_mlp_forward_impl.1} parent=5 // pred_check_branch
        %250 = sbr.rel (%p247) target = $region48
      $region47: #{_mlp_forward_impl.1} parent=5 // pred_region
        %s251 = ssub.s32 %s13, 1
        %s252 = smul.u32 20, %s18
        %s253 = ssub.s32 38, %s252
        %p254 = scmp.lt.s32.totalorder %s253, 20
        %s255 = scalar_select %p254, %s253, 20
        %s256 = smul.u32 8, %s255
        %p257 = scmp.lt.s32.totalorder %s252, 37
        %s258 = scalar_select %p257, %s252, 37
        %s259 = smul.addr %s258, 8
        %s260 = scalar_lea.vmem %s0, %s259
        %p261 = pneg %p39
        %p262 = pneg %p36
        %p263 = pneg %p60
        %p264 = pneg %p57
        %p265 = pneg %p81
        %p266 = pneg %p78
        %p267 = pneg %p102
        %p268 = pneg %p99
        %p269 = pneg %p123
        %p270 = pneg %p120
        %p271 = pneg %p144
        %p272 = pneg %p141
        %p273 = pneg %p165
        %p274 = pneg %p162
        %p275 = pneg %p191
        %p276 = pneg %p188
        %s277 = sand.u32 %s178, 1
        %s278 = sand.u32 %s178, 1
        %s279 = smul.addr %s278, 160
        %s280 = scalar_lea.vmem [#allocation2], %s279
        %s281 = smul.u32 20, %s18
        %s282 = ssub.s32 38, %s281
        %p283 = scmp.lt.s32.totalorder %s282, 20
        %s284 = scalar_select %p283, %s282, 20
        %s285 = smul.u32 8, %s284
        %p286 = scmp.lt.s32.totalorder %s281, 37
        %s287 = scalar_select %p286, %s281, 37
        %s288 = smul.addr %s287, 8
        %s289 = scalar_lea.vmem %s0, %s288
        %s290 = smul.u32 20, %s18
        %s291 = ssub.s32 38, %s290
        %p292 = scmp.lt.s32.totalorder %s291, 20
        %s293 = scalar_select %p292, %s291, 20
        %s294 = smul.u32 8, %s293
        %s295 = smul.u32 20, %s18
        %s296 = ssub.s32 38, %s295
        %p297 = scmp.lt.s32.totalorder %s296, 20
        %s298 = scalar_select %p297, %s296, 20
        %s299 = smul.u32 8, %s298
        %v300 = vld [vmem:[%s289] sm:$0xff]
        %v301 = vld [vmem:[%s289 + $0x8] sm:$0xff]
        %v302 = vld [vmem:[%s289 + $0x10] sm:$0xff]
        %v303 = vld [vmem:[%s289 + $0x18] sm:$0xff]
        %v304 = vld [vmem:[%s289 + $0x20] sm:$0xff]
        %v305 = vld [vmem:[%s289 + $0x28] sm:$0xff]
        %v306 = vld [vmem:[%s289 + $0x30] sm:$0xff]
        %v307 = vld [vmem:[%s289 + $0x38] sm:$0xff]
        %v308 = vld [vmem:[%s289 + $0x40] sm:$0xff]
        %v309 = vld [vmem:[%s289 + $0x48] sm:$0xff]
        %v310 = vld [vmem:[%s289 + $0x50] sm:$0xff]
        %v311 = vld [vmem:[%s289 + $0x58] sm:$0xff]
        %v312 = vld [vmem:[%s289 + $0x60] sm:$0xff]
        %v313 = vld [vmem:[%s289 + $0x68] sm:$0xff]
        %v314 = vld [vmem:[%s289 + $0x70] sm:$0xff]
        %v315 = vld [vmem:[%s289 + $0x78] sm:$0xff]
        %v316 = vld [vmem:[%s289 + $0x80] sm:$0xff]
        %v317 = vld [vmem:[%s289 + $0x88] sm:$0xff]
        %v318 = vld [vmem:[%s289 + $0x90] sm:$0xff]
        %v319 = vld [vmem:[%s289 + $0x98] sm:$0xff]
        %v320 = vld [vmem:[%s1] sm:$0xf]
        %v321 = vld [vmem:[%s1 + $0x4] sm:$0xf]
        %v322 = vld [vmem:[%s1 + $0x8] sm:$0xf]
        %v323 = vld [vmem:[%s1 + $0xc] sm:$0xf]
        %v324 = vld [vmem:[%s1 + $0x10] sm:$0xf]
        %v325 = vld [vmem:[%s1 + $0x14] sm:$0xf]
        %v326 = vld [vmem:[%s1 + $0x18] sm:$0xf]
        %v327 = vld [vmem:[%s1 + $0x1c] sm:$0xf]
        %v328 = vld [vmem:[%s1 + $0x20] sm:$0xf]
        %v329 = vld [vmem:[%s1 + $0x24] sm:$0xf]
        %v330 = vld [vmem:[%s1 + $0x28] sm:$0xf]
        %v331 = vld [vmem:[%s1 + $0x2c] sm:$0xf]
        %v332 = vld [vmem:[%s1 + $0x30] sm:$0xf]
        %v333 = vld [vmem:[%s1 + $0x34] sm:$0xf]
        %v334 = vld [vmem:[%s1 + $0x38] sm:$0xf]
        %v335 = vld [vmem:[%s1 + $0x3c] sm:$0xf]
        %v336 = vld [vmem:[%s2] sm:$0x1]
        %v337 = vpack.c.bf16 %v301, %v300
        %v338 = vpack.c.bf16 %v303, %v302
        %v339 = vpack.c.bf16 %v305, %v304
        %v340 = vpack.c.bf16 %v307, %v306
        %v341 = vpack.c.bf16 %v309, %v308
        %v342 = vpack.c.bf16 %v311, %v310
        %v343 = vpack.c.bf16 %v313, %v312
        %v344 = vpack.c.bf16 %v315, %v314
        %v345 = vpack.c.bf16 %v317, %v316
        %v346 = vpack.c.bf16 %v319, %v318
        %v348 = vperm.slane %v336, 0
        %v366 = vunpack.c.l.b16 %v320
        %v367 = vunpack.c.l.b16 %v321
        %v368 = vunpack.c.l.b16 %v322
        %v369 = vunpack.c.l.b16 %v323
        %v370 = vunpack.c.l.b16 %v324
        %v371 = vunpack.c.l.b16 %v325
        %v372 = vunpack.c.l.b16 %v326
        %v373 = vunpack.c.l.b16 %v327
        %v374 = vunpack.c.l.b16 %v328
        %v375 = vunpack.c.l.b16 %v329
        %v376 = vunpack.c.l.b16 %v330
        %v377 = vunpack.c.l.b16 %v331
        %v378 = vunpack.c.l.b16 %v332
        %v379 = vunpack.c.l.b16 %v333
        %v380 = vunpack.c.l.b16 %v334
        %v381 = vunpack.c.l.b16 %v335
        %v382 = vpack.c.b16 %v367, %v366
        %v383 = vpack.c.b16 %v369, %v368
        %v384 = vpack.c.b16 %v371, %v370
        %v385 = vpack.c.b16 %v373, %v372
        %v386 = vpack.c.b16 %v375, %v374
        %v387 = vpack.c.b16 %v377, %v376
        %v388 = vpack.c.b16 %v379, %v378
        %v389 = vpack.c.b16 %v381, %v380
        %398 = vmatpush.bf16.msra.mxu0 %v389
        %399 = vmatpush.bf16.msra.mxu0 %v388
        %400 = vmatpush.bf16.msra.mxu0 %v387
        %401 = vmatpush.bf16.msra.mxu0 %v386
        %402 = vmatpush.bf16.msra.mxu0 %v385
        %403 = vmatpush.bf16.msra.mxu0 %v384
        %404 = vmatpush.bf16.msra.mxu0 %v383
        %405 = vmatpush.bf16.msra.mxu0 %v382
        %406 = vmatmul.bf16.gmra.mxu0 %v337
        %v407 = vpop.f32.mrf.mxu0
        %v408 = vadd.f32 %v348, %v407
        %v409 = vpop.f32.mrf.mxu0
        %v410 = vadd.f32 %v348, %v409
        %411 = vmatmul.bf16.gmra.mxu0 %v338
        %v412 = vpop.f32.mrf.mxu0
        %v413 = vadd.f32 %v348, %v412
        %v414 = vpop.f32.mrf.mxu0
        %v415 = vadd.f32 %v348, %v414
        %416 = vmatmul.bf16.gmra.mxu0 %v339
        %v417 = vpop.f32.mrf.mxu0
        %v418 = vadd.f32 %v348, %v417
        %v419 = vpop.f32.mrf.mxu0
        %v420 = vadd.f32 %v348, %v419
        %421 = vmatmul.bf16.gmra.mxu0 %v340
        %v422 = vpop.f32.mrf.mxu0
        %v423 = vadd.f32 %v348, %v422
        %v424 = vpop.f32.mrf.mxu0
        %v425 = vadd.f32 %v348, %v424
        %426 = vmatmul.bf16.gmra.mxu0 %v341
        %v427 = vpop.f32.mrf.mxu0
        %v428 = vadd.f32 %v348, %v427
        %v429 = vpop.f32.mrf.mxu0
        %v430 = vadd.f32 %v348, %v429
        %431 = vmatmul.bf16.gmra.mxu0 %v342
        %v432 = vpop.f32.mrf.mxu0
        %v433 = vadd.f32 %v348, %v432
        %v434 = vpop.f32.mrf.mxu0
        %v435 = vadd.f32 %v348, %v434
        %436 = vmatmul.bf16.gmra.mxu0 %v343
        %v437 = vpop.f32.mrf.mxu0
        %v438 = vadd.f32 %v348, %v437
        %v439 = vpop.f32.mrf.mxu0
        %v440 = vadd.f32 %v348, %v439
        %441 = vmatmul.bf16.gmra.mxu0 %v344
        %v442 = vpop.f32.mrf.mxu0
        %v443 = vadd.f32 %v348, %v442
        %v444 = vpop.f32.mrf.mxu0
        %v445 = vadd.f32 %v348, %v444
        %446 = vmatmul.bf16.gmra.mxu0 %v345
        %v447 = vpop.f32.mrf.mxu0
        %v448 = vadd.f32 %v348, %v447
        %v449 = vpop.f32.mrf.mxu0
        %v450 = vadd.f32 %v348, %v449
        %451 = vmatmul.bf16.gmra.mxu0 %v346
        %v452 = vpop.f32.mrf.mxu0
        %v453 = vadd.f32 %v348, %v452
        %v454 = vpop.f32.mrf.mxu0
        %v455 = vadd.f32 %v348, %v454
        %456 = vdwg.mxu0
        %v457 = vmax.f32 %v408, 0.0
        %v458 = vmax.f32 %v410, 0.0
        %v459 = vmax.f32 %v413, 0.0
        %v460 = vmax.f32 %v415, 0.0
        %v461 = vmax.f32 %v418, 0.0
        %v462 = vmax.f32 %v420, 0.0
        %v463 = vmax.f32 %v423, 0.0
        %v464 = vmax.f32 %v425, 0.0
        %v465 = vmax.f32 %v428, 0.0
        %v466 = vmax.f32 %v430, 0.0
        %v467 = vmax.f32 %v433, 0.0
        %v468 = vmax.f32 %v435, 0.0
        %v469 = vmax.f32 %v438, 0.0
        %v470 = vmax.f32 %v440, 0.0
        %v471 = vmax.f32 %v443, 0.0
        %v472 = vmax.f32 %v445, 0.0
        %v473 = vmax.f32 %v448, 0.0
        %v474 = vmax.f32 %v450, 0.0
        %v475 = vmax.f32 %v453, 0.0
        %v476 = vmax.f32 %v455, 0.0
        %v477 = vld [vmem:[%s3] sm:$0xf]
        %v478 = vld [vmem:[%s3 + $0x4] sm:$0xf]
        %v479 = vld [vmem:[%s3 + $0x8] sm:$0xf]
        %v480 = vld [vmem:[%s3 + $0xc] sm:$0xf]
        %v481 = vld [vmem:[%s3 + $0x10] sm:$0xf]
        %v482 = vld [vmem:[%s3 + $0x14] sm:$0xf]
        %v483 = vld [vmem:[%s3 + $0x18] sm:$0xf]
        %v484 = vld [vmem:[%s3 + $0x1c] sm:$0xf]
        %v485 = vld [vmem:[%s3 + $0x20] sm:$0xf]
        %v486 = vld [vmem:[%s3 + $0x24] sm:$0xf]
        %v487 = vld [vmem:[%s3 + $0x28] sm:$0xf]
        %v488 = vld [vmem:[%s3 + $0x2c] sm:$0xf]
        %v489 = vld [vmem:[%s3 + $0x30] sm:$0xf]
        %v490 = vld [vmem:[%s3 + $0x34] sm:$0xf]
        %v491 = vld [vmem:[%s3 + $0x38] sm:$0xf]
        %v492 = vld [vmem:[%s3 + $0x3c] sm:$0xf]
        %v493 = vld [vmem:[%s4] sm:$0x1]
        %v494 = vpack.c.bf16 %v458, %v457
        %v495 = vpack.c.bf16 %v460, %v459
        %v496 = vpack.c.bf16 %v462, %v461
        %v497 = vpack.c.bf16 %v464, %v463
        %v498 = vpack.c.bf16 %v466, %v465
        %v499 = vpack.c.bf16 %v468, %v467
        %v500 = vpack.c.bf16 %v470, %v469
        %v501 = vpack.c.bf16 %v472, %v471
        %v502 = vpack.c.bf16 %v474, %v473
        %v503 = vpack.c.bf16 %v476, %v475
        %v505 = vperm.slane %v493, 0
        %v523 = vunpack.c.l.b16 %v477
        %v524 = vunpack.c.l.b16 %v478
        %v525 = vunpack.c.l.b16 %v479
        %v526 = vunpack.c.l.b16 %v480
        %v527 = vunpack.c.l.b16 %v481
        %v528 = vunpack.c.l.b16 %v482
        %v529 = vunpack.c.l.b16 %v483
        %v530 = vunpack.c.l.b16 %v484
        %v531 = vunpack.c.l.b16 %v485
        %v532 = vunpack.c.l.b16 %v486
        %v533 = vunpack.c.l.b16 %v487
        %v534 = vunpack.c.l.b16 %v488
        %v535 = vunpack.c.l.b16 %v489
        %v536 = vunpack.c.l.b16 %v490
        %v537 = vunpack.c.l.b16 %v491
        %v538 = vunpack.c.l.b16 %v492
        %v539 = vpack.c.b16 %v524, %v523
        %v540 = vpack.c.b16 %v526, %v525
        %v541 = vpack.c.b16 %v528, %v527
        %v542 = vpack.c.b16 %v530, %v529
        %v543 = vpack.c.b16 %v532, %v531
        %v544 = vpack.c.b16 %v534, %v533
        %v545 = vpack.c.b16 %v536, %v535
        %v546 = vpack.c.b16 %v538, %v537
        %555 = vmatpush.bf16.msra.mxu0 %v546
        %556 = vmatpush.bf16.msra.mxu0 %v545
        %557 = vmatpush.bf16.msra.mxu0 %v544
        %558 = vmatpush.bf16.msra.mxu0 %v543
        %559 = vmatpush.bf16.msra.mxu0 %v542
        %560 = vmatpush.bf16.msra.mxu0 %v541
        %561 = vmatpush.bf16.msra.mxu0 %v540
        %562 = vmatpush.bf16.msra.mxu0 %v539
        %563 = vmatmul.bf16.gmra.mxu0 %v494
        %v564 = vpop.f32.mrf.mxu0
        %v565 = vadd.f32 %v505, %v564
        %v566 = vpop.f32.mrf.mxu0
        %v567 = vadd.f32 %v505, %v566
        %568 = vmatmul.bf16.gmra.mxu0 %v495
        %v569 = vpop.f32.mrf.mxu0
        %v570 = vadd.f32 %v505, %v569
        %v571 = vpop.f32.mrf.mxu0
        %v572 = vadd.f32 %v505, %v571
        %573 = vmatmul.bf16.gmra.mxu0 %v496
        %v574 = vpop.f32.mrf.mxu0
        %v575 = vadd.f32 %v505, %v574
        %v576 = vpop.f32.mrf.mxu0
        %v577 = vadd.f32 %v505, %v576
        %578 = vmatmul.bf16.gmra.mxu0 %v497
        %v579 = vpop.f32.mrf.mxu0
        %v580 = vadd.f32 %v505, %v579
        %v581 = vpop.f32.mrf.mxu0
        %v582 = vadd.f32 %v505, %v581
        %583 = vmatmul.bf16.gmra.mxu0 %v498
        %v584 = vpop.f32.mrf.mxu0
        %v585 = vadd.f32 %v505, %v584
        %v586 = vpop.f32.mrf.mxu0
        %v587 = vadd.f32 %v505, %v586
        %588 = vmatmul.bf16.gmra.mxu0 %v499
        %v589 = vpop.f32.mrf.mxu0
        %v590 = vadd.f32 %v505, %v589
        %v591 = vpop.f32.mrf.mxu0
        %v592 = vadd.f32 %v505, %v591
        %593 = vmatmul.bf16.gmra.mxu0 %v500
        %v594 = vpop.f32.mrf.mxu0
        %v595 = vadd.f32 %v505, %v594
        %v596 = vpop.f32.mrf.mxu0
        %v597 = vadd.f32 %v505, %v596
        %598 = vmatmul.bf16.gmra.mxu0 %v501
        %v599 = vpop.f32.mrf.mxu0
        %v600 = vadd.f32 %v505, %v599
        %v601 = vpop.f32.mrf.mxu0
        %v602 = vadd.f32 %v505, %v601
        %603 = vmatmul.bf16.gmra.mxu0 %v502
        %v604 = vpop.f32.mrf.mxu0
        %v605 = vadd.f32 %v505, %v604
        %v606 = vpop.f32.mrf.mxu0
        %v607 = vadd.f32 %v505, %v606
        %608 = vmatmul.bf16.gmra.mxu0 %v503
        %v609 = vpop.f32.mrf.mxu0
        %v610 = vadd.f32 %v505, %v609
        %v611 = vpop.f32.mrf.mxu0
        %v612 = vadd.f32 %v505, %v611
        %613 = vdwg.mxu0
        %v614 = vmax.f32 %v565, 0.0
        %v615 = vmax.f32 %v567, 0.0
        %v616 = vmax.f32 %v570, 0.0
        %v617 = vmax.f32 %v572, 0.0
        %v618 = vmax.f32 %v575, 0.0
        %v619 = vmax.f32 %v577, 0.0
        %v620 = vmax.f32 %v580, 0.0
        %v621 = vmax.f32 %v582, 0.0
        %v622 = vmax.f32 %v585, 0.0
        %v623 = vmax.f32 %v587, 0.0
        %v624 = vmax.f32 %v590, 0.0
        %v625 = vmax.f32 %v592, 0.0
        %v626 = vmax.f32 %v595, 0.0
        %v627 = vmax.f32 %v597, 0.0
        %v628 = vmax.f32 %v600, 0.0
        %v629 = vmax.f32 %v602, 0.0
        %v630 = vmax.f32 %v605, 0.0
        %v631 = vmax.f32 %v607, 0.0
        %v632 = vmax.f32 %v610, 0.0
        %v633 = vmax.f32 %v612, 0.0
        %v634 = vld [vmem:[%s5] sm:$0xf]
        %v635 = vld [vmem:[%s5 + $0x4] sm:$0xf]
        %v636 = vld [vmem:[%s5 + $0x8] sm:$0xf]
        %v637 = vld [vmem:[%s5 + $0xc] sm:$0xf]
        %v638 = vld [vmem:[%s5 + $0x10] sm:$0xf]
        %v639 = vld [vmem:[%s5 + $0x14] sm:$0xf]
        %v640 = vld [vmem:[%s5 + $0x18] sm:$0xf]
        %v641 = vld [vmem:[%s5 + $0x1c] sm:$0xf]
        %v642 = vld [vmem:[%s5 + $0x20] sm:$0xf]
        %v643 = vld [vmem:[%s5 + $0x24] sm:$0xf]
        %v644 = vld [vmem:[%s5 + $0x28] sm:$0xf]
        %v645 = vld [vmem:[%s5 + $0x2c] sm:$0xf]
        %v646 = vld [vmem:[%s5 + $0x30] sm:$0xf]
        %v647 = vld [vmem:[%s5 + $0x34] sm:$0xf]
        %v648 = vld [vmem:[%s5 + $0x38] sm:$0xf]
        %v649 = vld [vmem:[%s5 + $0x3c] sm:$0xf]
        %v650 = vld [vmem:[%s6] sm:$0x1]
        %v651 = vpack.c.bf16 %v615, %v614
        %v652 = vpack.c.bf16 %v617, %v616
        %v653 = vpack.c.bf16 %v619, %v618
        %v654 = vpack.c.bf16 %v621, %v620
        %v655 = vpack.c.bf16 %v623, %v622
        %v656 = vpack.c.bf16 %v625, %v624
        %v657 = vpack.c.bf16 %v627, %v626
        %v658 = vpack.c.bf16 %v629, %v628
        %v659 = vpack.c.bf16 %v631, %v630
        %v660 = vpack.c.bf16 %v633, %v632
        %v662 = vperm.slane %v650, 0
        %v680 = vunpack.c.l.b16 %v634
        %v681 = vunpack.c.l.b16 %v635
        %v682 = vunpack.c.l.b16 %v636
        %v683 = vunpack.c.l.b16 %v637
        %v684 = vunpack.c.l.b16 %v638
        %v685 = vunpack.c.l.b16 %v639
        %v686 = vunpack.c.l.b16 %v640
        %v687 = vunpack.c.l.b16 %v641
        %v688 = vunpack.c.l.b16 %v642
        %v689 = vunpack.c.l.b16 %v643
        %v690 = vunpack.c.l.b16 %v644
        %v691 = vunpack.c.l.b16 %v645
        %v692 = vunpack.c.l.b16 %v646
        %v693 = vunpack.c.l.b16 %v647
        %v694 = vunpack.c.l.b16 %v648
        %v695 = vunpack.c.l.b16 %v649
        %v696 = vpack.c.b16 %v681, %v680
        %v697 = vpack.c.b16 %v683, %v682
        %v698 = vpack.c.b16 %v685, %v684
        %v699 = vpack.c.b16 %v687, %v686
        %v700 = vpack.c.b16 %v689, %v688
        %v701 = vpack.c.b16 %v691, %v690
        %v702 = vpack.c.b16 %v693, %v692
        %v703 = vpack.c.b16 %v695, %v694
        %712 = vmatpush.bf16.msra.mxu0 %v703
        %713 = vmatpush.bf16.msra.mxu0 %v702
        %714 = vmatpush.bf16.msra.mxu0 %v701
        %715 = vmatpush.bf16.msra.mxu0 %v700
        %716 = vmatpush.bf16.msra.mxu0 %v699
        %717 = vmatpush.bf16.msra.mxu0 %v698
        %718 = vmatpush.bf16.msra.mxu0 %v697
        %719 = vmatpush.bf16.msra.mxu0 %v696
        %720 = vmatmul.bf16.gmra.mxu0 %v651
        %v721 = vpop.f32.mrf.mxu0
        %v722 = vadd.f32 %v662, %v721
        %v723 = vpop.f32.mrf.mxu0
        %v724 = vadd.f32 %v662, %v723
        %725 = vmatmul.bf16.gmra.mxu0 %v652
        %v726 = vpop.f32.mrf.mxu0
        %v727 = vadd.f32 %v662, %v726
        %v728 = vpop.f32.mrf.mxu0
        %v729 = vadd.f32 %v662, %v728
        %730 = vmatmul.bf16.gmra.mxu0 %v653
        %v731 = vpop.f32.mrf.mxu0
        %v732 = vadd.f32 %v662, %v731
        %v733 = vpop.f32.mrf.mxu0
        %v734 = vadd.f32 %v662, %v733
        %735 = vmatmul.bf16.gmra.mxu0 %v654
        %v736 = vpop.f32.mrf.mxu0
        %v737 = vadd.f32 %v662, %v736
        %v738 = vpop.f32.mrf.mxu0
        %v739 = vadd.f32 %v662, %v738
        %740 = vmatmul.bf16.gmra.mxu0 %v655
        %v741 = vpop.f32.mrf.mxu0
        %v742 = vadd.f32 %v662, %v741
        %v743 = vpop.f32.mrf.mxu0
        %v744 = vadd.f32 %v662, %v743
        %745 = vmatmul.bf16.gmra.mxu0 %v656
        %v746 = vpop.f32.mrf.mxu0
        %v747 = vadd.f32 %v662, %v746
        %v748 = vpop.f32.mrf.mxu0
        %v749 = vadd.f32 %v662, %v748
        %750 = vmatmul.bf16.gmra.mxu0 %v657
        %v751 = vpop.f32.mrf.mxu0
        %v752 = vadd.f32 %v662, %v751
        %v753 = vpop.f32.mrf.mxu0
        %v754 = vadd.f32 %v662, %v753
        %755 = vmatmul.bf16.gmra.mxu0 %v658
        %v756 = vpop.f32.mrf.mxu0
        %v757 = vadd.f32 %v662, %v756
        %v758 = vpop.f32.mrf.mxu0
        %v759 = vadd.f32 %v662, %v758
        %760 = vmatmul.bf16.gmra.mxu0 %v659
        %v761 = vpop.f32.mrf.mxu0
        %v762 = vadd.f32 %v662, %v761
        %v763 = vpop.f32.mrf.mxu0
        %v764 = vadd.f32 %v662, %v763
        %765 = vmatmul.bf16.gmra.mxu0 %v660
        %v766 = vpop.f32.mrf.mxu0
        %v767 = vadd.f32 %v662, %v766
        %v768 = vpop.f32.mrf.mxu0
        %v769 = vadd.f32 %v662, %v768
        %770 = vdwg.mxu0
        %771 = vst [vmem:[%s280] sm:$0xff] %v722
        %772 = vst [vmem:[%s280 + $0x8] sm:$0xff] %v724
        %773 = vst [vmem:[%s280 + $0x10] sm:$0xff] %v727
        %774 = vst [vmem:[%s280 + $0x18] sm:$0xff] %v729
        %775 = vst [vmem:[%s280 + $0x20] sm:$0xff] %v732
        %776 = vst [vmem:[%s280 + $0x28] sm:$0xff] %v734
        %777 = vst [vmem:[%s280 + $0x30] sm:$0xff] %v737
        %778 = vst [vmem:[%s280 + $0x38] sm:$0xff] %v739
        %779 = vst [vmem:[%s280 + $0x40] sm:$0xff] %v742
        %780 = vst [vmem:[%s280 + $0x48] sm:$0xff] %v744
        %781 = vst [vmem:[%s280 + $0x50] sm:$0xff] %v747
        %782 = vst [vmem:[%s280 + $0x58] sm:$0xff] %v749
        %783 = vst [vmem:[%s280 + $0x60] sm:$0xff] %v752
        %784 = vst [vmem:[%s280 + $0x68] sm:$0xff] %v754
        %785 = vst [vmem:[%s280 + $0x70] sm:$0xff] %v757
        %786 = vst [vmem:[%s280 + $0x78] sm:$0xff] %v759
        %787 = vst [vmem:[%s280 + $0x80] sm:$0xff] %v762
        %788 = vst [vmem:[%s280 + $0x88] sm:$0xff] %v764
        %789 = vst [vmem:[%s280 + $0x90] sm:$0xff] %v767
        %790 = vst [vmem:[%s280 + $0x98] sm:$0xff] %v769
        %s791 = sand.u32 %s178, 1
        %s792 = sand.u32 %s178, 1
        %s793 = smul.addr %s792, 160
        %s794 = scalar_lea.vmem [#allocation2], %s793
        // Predicated region
        $region49: #{_mlp_forward_impl.1} parent=47 // pred_check
          %p795 = pneg %p188
        $region50: #{_mlp_forward_impl.1} parent=47 // pred_check_branch
          %797 = sbr.rel (%p795) target = $region52
        $region51: #{_mlp_forward_impl.1} parent=47 // pred_region
          %s798 = smul.u32 20, %s18
          %s799 = ssub.s32 38, %s798
          %p800 = scmp.lt.s32.totalorder %s799, 20
          %s801 = scalar_select %p800, %s799, 20
          %s802 = smul.u32 8, %s801
          %p803 = scmp.ne.s32.totalorder 0, %s802
          %s804 = smul.addr %s798, 8
          %s805 = scalar_lea.vmem %s7, %s804
          // Predicated region
          $region53: #{_mlp_forward_impl.1} parent=51 // pred_check
            %p806 = pneg %p803
          $region54: #{_mlp_forward_impl.1} parent=51 // pred_check_branch
            %808 = sbr.rel (%p806) target = $region56
          $region55: #{_mlp_forward_impl.1} parent=51 // pred_region
            // Predicated region
            $region57: #{_mlp_forward_impl.1} parent=55 // pred_check
              _
            $region58: #{_mlp_forward_impl.1} parent=55 // pred_check_branch
              %810 = sbr.rel (0) target = $region60
            $region59: #{_mlp_forward_impl.1} parent=55 // pred_region
              // Predicated region
              $region79: #{_mlp_forward_impl.1} parent=59 // pred_check
                _
              $region80: #{_mlp_forward_impl.1} parent=59 // pred_check_branch
                %899 = sbr.rel (0) target = $region82
              $region81: #{_mlp_forward_impl.1} parent=59 // pred_region
                %s900 = sdiv.u32.pop %s801, 20
                %s901 = srem.u32.pop %s801, 20
                // While loop
                $region83: #{_mlp_forward_impl.1} parent=81 // loop_pre_header
                  _
                $region84: #{_mlp_forward_impl.1} parent=81 // loop_header
                  %s903 = sphi 0, %s905
                  %p904 = scmp.ge.s32.totalorder %s903, %s900
                  %s908 = sphi 0, %s953
                  %s909 = sphi %s794, %s956
                  %s910 = sphi %s805, %s957
                $region85: #{_mlp_forward_impl.1} parent=81 // loop_header_branch
                  %907 = sbr.rel (%p904) target = $region89
                $region86: #{_mlp_forward_impl.1} parent=81 // loop_body
                  %v911 = vld [vmem:[%s909] sm:$0xff]
                  %912 = vst [vmem:[%s910] sm:$0xff] %v911
                  %v913 = vld [vmem:[%s909 + $0x8] sm:$0xff]
                  %914 = vst [vmem:[%s910 + $0x8] sm:$0xff] %v913
                  %v915 = vld [vmem:[%s909 + $0x10] sm:$0xff]
                  %916 = vst [vmem:[%s910 + $0x10] sm:$0xff] %v915
                  %v917 = vld [vmem:[%s909 + $0x18] sm:$0xff]
                  %918 = vst [vmem:[%s910 + $0x18] sm:$0xff] %v917
                  %v919 = vld [vmem:[%s909 + $0x20] sm:$0xff]
                  %920 = vst [vmem:[%s910 + $0x20] sm:$0xff] %v919
                  %v921 = vld [vmem:[%s909 + $0x28] sm:$0xff]
                  %922 = vst [vmem:[%s910 + $0x28] sm:$0xff] %v921
                  %v923 = vld [vmem:[%s909 + $0x30] sm:$0xff]
                  %924 = vst [vmem:[%s910 + $0x30] sm:$0xff] %v923
                  %v925 = vld [vmem:[%s909 + $0x38] sm:$0xff]
                  %926 = vst [vmem:[%s910 + $0x38] sm:$0xff] %v925
                  %v927 = vld [vmem:[%s909 + $0x40] sm:$0xff]
                  %928 = vst [vmem:[%s910 + $0x40] sm:$0xff] %v927
                  %v929 = vld [vmem:[%s909 + $0x48] sm:$0xff]
                  %930 = vst [vmem:[%s910 + $0x48] sm:$0xff] %v929
                  %v931 = vld [vmem:[%s909 + $0x50] sm:$0xff]
                  %932 = vst [vmem:[%s910 + $0x50] sm:$0xff] %v931
                  %v933 = vld [vmem:[%s909 + $0x58] sm:$0xff]
                  %934 = vst [vmem:[%s910 + $0x58] sm:$0xff] %v933
                  %v935 = vld [vmem:[%s909 + $0x60] sm:$0xff]
                  %936 = vst [vmem:[%s910 + $0x60] sm:$0xff] %v935
                  %v937 = vld [vmem:[%s909 + $0x68] sm:$0xff]
                  %938 = vst [vmem:[%s910 + $0x68] sm:$0xff] %v937
                  %v939 = vld [vmem:[%s909 + $0x70] sm:$0xff]
                  %940 = vst [vmem:[%s910 + $0x70] sm:$0xff] %v939
                  %v941 = vld [vmem:[%s909 + $0x78] sm:$0xff]
                  %942 = vst [vmem:[%s910 + $0x78] sm:$0xff] %v941
                  %v943 = vld [vmem:[%s909 + $0x80] sm:$0xff]
                  %944 = vst [vmem:[%s910 + $0x80] sm:$0xff] %v943
                  %v945 = vld [vmem:[%s909 + $0x88] sm:$0xff]
                  %946 = vst [vmem:[%s910 + $0x88] sm:$0xff] %v945
                  %v947 = vld [vmem:[%s909 + $0x90] sm:$0xff]
                  %948 = vst [vmem:[%s910 + $0x90] sm:$0xff] %v947
                  %v949 = vld [vmem:[%s909 + $0x98] sm:$0xff]
                  %950 = vst [vmem:[%s910 + $0x98] sm:$0xff] %v949
                  %s951 = sadd.s32 1, %s908
                  %p952 = scmp.ge.s32.totalorder %s951, %s900
                  %s953 = scalar_select %p952, 0, %s951
                  %s954 = smul.u32 %s953, 160
                  %s955 = smul.u32 %s953, 160
                  %s956 = scalar_lea.vmem %s794, %s954 [#allocation2]
                  %s957 = scalar_lea.vmem %s805, %s955
                $region87: #{_mlp_forward_impl.1} parent=81 // loop_footer
                  %s905 = sadd.s32 %s903, 1
                $region88: #{_mlp_forward_impl.1} parent=81 // loop_footer_branch
                  %902 = sbr.rel target = $region84
                $region89: #{_mlp_forward_impl.1} parent=81 // loop_exit
                  _
                %s958 = sdiv.u32.pop %s801, 20
                %s959 = srem.u32.pop %s801, 20
                %s960 = smul.u32 %s958, 20
                %s961 = smul.u32 8, %s960
                %s962 = scalar_lea.vmem %s794, %s961 [#allocation2]
                %s963 = smul.u32 8, %s960
                %s964 = scalar_lea.vmem %s805, %s963
                // While loop
                $region90: #{_mlp_forward_impl.1} parent=81 // loop_pre_header
                  _
                $region91: #{_mlp_forward_impl.1} parent=81 // loop_header
                  %s966 = sphi 0, %s968
                  %p967 = scmp.ge.s32.totalorder %s966, %s959
                  %s971 = sphi 0, %s978
                  %s972 = sphi %s962, %s981
                  %s973 = sphi %s964, %s982
                $region92: #{_mlp_forward_impl.1} parent=81 // loop_header_branch
                  %970 = sbr.rel (%p967) target = $region96
                $region93: #{_mlp_forward_impl.1} parent=81 // loop_body
                  %v974 = vld [vmem:[%s972] sm:$0xff]
                  %975 = vst [vmem:[%s973] sm:$0xff] %v974
                  %s976 = sadd.s32 1, %s971
                  %p977 = scmp.ge.s32.totalorder %s976, %s959
                  %s978 = scalar_select %p977, 0, %s976
                  %s979 = smul.u32 %s978, 8
                  %s980 = smul.u32 %s978, 8
                  %s981 = scalar_lea.vmem %s962, %s979 [#allocation2]
                  %s982 = scalar_lea.vmem %s964, %s980
                $region94: #{_mlp_forward_impl.1} parent=81 // loop_footer
                  %s968 = sadd.s32 %s966, 1
                $region95: #{_mlp_forward_impl.1} parent=81 // loop_footer_branch
                  %965 = sbr.rel target = $region91
                $region96: #{_mlp_forward_impl.1} parent=81 // loop_exit
                  _
              $region82: #{_mlp_forward_impl.1} parent=59 // pred_fallthru
                _
              // Predicated region
              $region97: #{_mlp_forward_impl.1} parent=59 // pred_check
                _
              $region98: #{_mlp_forward_impl.1} parent=59 // pred_check_branch
                %984 = sbr.rel target = $region100
              $region99: #{_mlp_forward_impl.1} parent=59 // pred_region
                _
              $region100: #{_mlp_forward_impl.1} parent=59 // pred_fallthru
                _
            $region60: #{_mlp_forward_impl.1} parent=55 // pred_fallthru
              _
            // Predicated region
            $region61: #{_mlp_forward_impl.1} parent=55 // pred_check
              _
            $region62: #{_mlp_forward_impl.1} parent=55 // pred_check_branch
              %812 = sbr.rel target = $region64
            $region63: #{_mlp_forward_impl.1} parent=55 // pred_region
              %s814 = ssub.s32 256, 1
              %s815 = sdiv.u32.pop %s801, 20
              %s816 = srem.u32.pop %s801, 20
              // While loop
              $region65: #{_mlp_forward_impl.1} parent=63 // loop_pre_header
                _
              $region66: #{_mlp_forward_impl.1} parent=63 // loop_header
                %s818 = sphi 0, %s820
                %p819 = scmp.ge.s32.totalorder %s818, %s815
                %s823 = sphi 0, %s868
                %s824 = sphi %s794, %s871
                %s825 = sphi %s805, %s872
              $region67: #{_mlp_forward_impl.1} parent=63 // loop_header_branch
                %822 = sbr.rel (%p819) target = $region71
              $region68: #{_mlp_forward_impl.1} parent=63 // loop_body
                %v826 = vld [vmem:[%s824] sm:%s814]
                %827 = vst [vmem:[%s825] sm:%s814] %v826
                %v828 = vld [vmem:[%s824 + $0x8] sm:%s814]
                %829 = vst [vmem:[%s825 + $0x8] sm:%s814] %v828
                %v830 = vld [vmem:[%s824 + $0x10] sm:%s814]
                %831 = vst [vmem:[%s825 + $0x10] sm:%s814] %v830
                %v832 = vld [vmem:[%s824 + $0x18] sm:%s814]
                %833 = vst [vmem:[%s825 + $0x18] sm:%s814] %v832
                %v834 = vld [vmem:[%s824 + $0x20] sm:%s814]
                %835 = vst [vmem:[%s825 + $0x20] sm:%s814] %v834
                %v836 = vld [vmem:[%s824 + $0x28] sm:%s814]
                %837 = vst [vmem:[%s825 + $0x28] sm:%s814] %v836
                %v838 = vld [vmem:[%s824 + $0x30] sm:%s814]
                %839 = vst [vmem:[%s825 + $0x30] sm:%s814] %v838
                %v840 = vld [vmem:[%s824 + $0x38] sm:%s814]
                %841 = vst [vmem:[%s825 + $0x38] sm:%s814] %v840
                %v842 = vld [vmem:[%s824 + $0x40] sm:%s814]
                %843 = vst [vmem:[%s825 + $0x40] sm:%s814] %v842
                %v844 = vld [vmem:[%s824 + $0x48] sm:%s814]
                %845 = vst [vmem:[%s825 + $0x48] sm:%s814] %v844
                %v846 = vld [vmem:[%s824 + $0x50] sm:%s814]
                %847 = vst [vmem:[%s825 + $0x50] sm:%s814] %v846
                %v848 = vld [vmem:[%s824 + $0x58] sm:%s814]
                %849 = vst [vmem:[%s825 + $0x58] sm:%s814] %v848
                %v850 = vld [vmem:[%s824 + $0x60] sm:%s814]
                %851 = vst [vmem:[%s825 + $0x60] sm:%s814] %v850
                %v852 = vld [vmem:[%s824 + $0x68] sm:%s814]
                %853 = vst [vmem:[%s825 + $0x68] sm:%s814] %v852
                %v854 = vld [vmem:[%s824 + $0x70] sm:%s814]
                %855 = vst [vmem:[%s825 + $0x70] sm:%s814] %v854
                %v856 = vld [vmem:[%s824 + $0x78] sm:%s814]
                %857 = vst [vmem:[%s825 + $0x78] sm:%s814] %v856
                %v858 = vld [vmem:[%s824 + $0x80] sm:%s814]
                %859 = vst [vmem:[%s825 + $0x80] sm:%s814] %v858
                %v860 = vld [vmem:[%s824 + $0x88] sm:%s814]
                %861 = vst [vmem:[%s825 + $0x88] sm:%s814] %v860
                %v862 = vld [vmem:[%s824 + $0x90] sm:%s814]
                %863 = vst [vmem:[%s825 + $0x90] sm:%s814] %v862
                %v864 = vld [vmem:[%s824 + $0x98] sm:%s814]
                %865 = vst [vmem:[%s825 + $0x98] sm:%s814] %v864
                %s866 = sadd.s32 1, %s823
                %p867 = scmp.ge.s32.totalorder %s866, %s815
                %s868 = scalar_select %p867, 0, %s866
                %s869 = smul.u32 %s868, 160
                %s870 = smul.u32 %s868, 160
                %s871 = scalar_lea.vmem %s794, %s869 [#allocation2]
                %s872 = scalar_lea.vmem %s805, %s870
              $region69: #{_mlp_forward_impl.1} parent=63 // loop_footer
                %s820 = sadd.s32 %s818, 1
              $region70: #{_mlp_forward_impl.1} parent=63 // loop_footer_branch
                %817 = sbr.rel target = $region66
              $region71: #{_mlp_forward_impl.1} parent=63 // loop_exit
                _
              %s873 = sdiv.u32.pop %s801, 20
              %s874 = srem.u32.pop %s801, 20
              %s875 = smul.u32 %s873, 20
              %s876 = smul.u32 8, %s875
              %s877 = scalar_lea.vmem %s794, %s876 [#allocation2]
              %s878 = smul.u32 8, %s875
              %s879 = scalar_lea.vmem %s805, %s878
              // While loop
              $region72: #{_mlp_forward_impl.1} parent=63 // loop_pre_header
                _
              $region73: #{_mlp_forward_impl.1} parent=63 // loop_header
                %s881 = sphi 0, %s883
                %p882 = scmp.ge.s32.totalorder %s881, %s874
                %s886 = sphi 0, %s893
                %s887 = sphi %s877, %s896
                %s888 = sphi %s879, %s897
              $region74: #{_mlp_forward_impl.1} parent=63 // loop_header_branch
                %885 = sbr.rel (%p882) target = $region78
              $region75: #{_mlp_forward_impl.1} parent=63 // loop_body
                %v889 = vld [vmem:[%s887] sm:%s814]
                %890 = vst [vmem:[%s888] sm:%s814] %v889
                %s891 = sadd.s32 1, %s886
                %p892 = scmp.ge.s32.totalorder %s891, %s874
                %s893 = scalar_select %p892, 0, %s891
                %s894 = smul.u32 %s893, 8
                %s895 = smul.u32 %s893, 8
                %s896 = scalar_lea.vmem %s877, %s894 [#allocation2]
                %s897 = scalar_lea.vmem %s879, %s895
              $region76: #{_mlp_forward_impl.1} parent=63 // loop_footer
                %s883 = sadd.s32 %s881, 1
              $region77: #{_mlp_forward_impl.1} parent=63 // loop_footer_branch
                %880 = sbr.rel target = $region73
              $region78: #{_mlp_forward_impl.1} parent=63 // loop_exit
                _
            $region64: #{_mlp_forward_impl.1} parent=55 // pred_fallthru
              _
          $region56: #{_mlp_forward_impl.1} parent=51 // pred_fallthru
            _
          %985 = vnop
        $region52: #{_mlp_forward_impl.1} parent=47 // pred_fallthru
          _
      $region48: #{_mlp_forward_impl.1} parent=5 // pred_fallthru
        _
      %p986 = scmp.le.s32.totalorder 2, %s13
      // Predicated region
      $region101: #{_mlp_forward_impl.1} parent=5 // pred_check
        %p987 = pneg %p986
      $region102: #{_mlp_forward_impl.1} parent=5 // pred_check_branch
        %989 = sbr.rel (%p987) target = $region104
      $region103: #{_mlp_forward_impl.1} parent=5 // pred_region
        %s990 = ssub.s32 %s13, 2
        // Predicated region
        $region105: #{_mlp_forward_impl.1} parent=103 // pred_check
          %p991 = pneg %p194
        $region106: #{_mlp_forward_impl.1} parent=103 // pred_check_branch
          %993 = sbr.rel (%p991) target = $region108
        $region107: #{_mlp_forward_impl.1} parent=103 // pred_region
          %s994 = sand.u32 %s179, 1
          %s995 = sand.u32 %s179, 1
          %s996 = smul.addr %s995, 160
          %s997 = scalar_lea.vmem [#allocation2], %s996
        $region108: #{_mlp_forward_impl.1} parent=103 // pred_fallthru
          _
      $region104: #{_mlp_forward_impl.1} parent=5 // pred_fallthru
        _
    $region6: #{_mlp_forward_impl.1} parent=1 // loop_footer
      %s17 = sadd.s32 1, %s13
    $region7: #{_mlp_forward_impl.1} parent=1 // loop_footer_branch
      %12 = sbr.rel target = $region3
    $region8: #{_mlp_forward_impl.1} parent=1 // loop_exit
      _

// kernel: _mlp_forward_impl.1
$region0: #{_mlp_forward_impl.1}
  #allocation0 [shape = 'u32[]', space=smem, size = 0x4, offset = 0x4, fixed_abs, tag = 'smem constant byte address 0x4 - core index']
  #allocation1 [shape = 'u32[72,128]{1,0:T(1,128)}', space=vmem, size = 0x9000, scoped, tag = 'internal scratch']
  %s0 = inlined_call_operand.vmem [shape: f32[300,128], index: 0, kind: input, shape index: {}]
  %s1 = inlined_call_operand.vmem [shape: bf16[128,128], index: 1, kind: input, shape index: {}]
  %s2 = inlined_call_operand.vmem [shape: f32[1,128], index: 2, kind: input, shape index: {}]
  %s3 = inlined_call_operand.vmem [shape: bf16[128,128], index: 3, kind: input, shape index: {}]
  %s4 = inlined_call_operand.vmem [shape: f32[1,128], index: 4, kind: input, shape index: {}]
  %s5 = inlined_call_operand.vmem [shape: bf16[128,128], index: 5, kind: input, shape index: {}]
  %s6 = inlined_call_operand.vmem [shape: f32[1,128], index: 6, kind: input, shape index: {}]
  %s7 = inlined_call_operand.vmem [shape: f32[300,128], index: 7, kind: output, shape index: {}]
  %s8 = sld [smem:[#allocation0]]
  $region109: #{_mlp_forward_impl.1} parent=0
    _
  %s10 = ssub.s32 1, %s8
  %s11 = scalar_select 0, %s10, %s8
  $region1: #{_mlp_forward_impl.1} parent=0
    #allocation2 [shape = 'u8[163840]{0}', space=vmem, size = 0x28000, scoped, tag = 'output window, operand 0']
    loop: start=0, step=1, limit=4
    $region2: #{_mlp_forward_impl.1} parent=1 // loop_pre_header
      _
    $region3: #{_mlp_forward_impl.1} parent=1 // loop_header
      %s13 = sphi 0, %s17
      %p14 = scmp.ge.s32.totalorder %s13, 4
      %s23 = sphi 0, %s25
      %s26 = sphi 0, %s23
      %s27 = sphi 0, %s26
      %s43 = sphi 0, %s27
      %s47 = sphi 0, %s47
      %s49 = sphi 0, %s47
      %s50 = sphi 0, %s49
      %s64 = sphi 0, %s50
      %s68 = sphi 0, %s68
      %s70 = sphi 0, %s68
      %s71 = sphi 0, %s70
      %s85 = sphi 0, %s71
      %s89 = sphi 0, %s89
      %s91 = sphi 0, %s89
      %s92 = sphi 0, %s91
      %s106 = sphi 0, %s92
      %s110 = sphi 0, %s110
      %s112 = sphi 0, %s110
      %s113 = sphi 0, %s112
      %s127 = sphi 0, %s113
      %s131 = sphi 0, %s131
      %s133 = sphi 0, %s131
      %s134 = sphi 0, %s133
      %s148 = sphi 0, %s134
      %s152 = sphi 0, %s152
      %s154 = sphi 0, %s152
      %s155 = sphi 0, %s154
      %s169 = sphi 0, %s155
      %s175 = sphi 0, %s177
      %s178 = sphi 0, %s175
      %s179 = sphi 0, %s178
      %s195 = sphi 0, %s179
    $region4: #{_mlp_forward_impl.1} parent=1 // loop_header_branch
      %16 = sbr.rel (%p14) target = $region8
    $region5: #{_mlp_forward_impl.1} parent=1 // loop_body
      %s18 = ssub.s32 %s13, 1
      %s19 = ssub.s32 %s13, 2
      %s20 = sadd.s32 %s13, 1
      %s21 = ssub.s32 %s13, %s20
      %p22 = scmp.eq.s32.totalorder %s21, 0
      %s24 = sadd.s32 %s23, 1
      %s25 = scalar_select %p22, %s23, %s24
      %p28 = pneg %p22
      %p29 = scmp.eq.s32.totalorder %s13, 1
      %p30 = por %p28, %p29
      %p31 = scmp.ne.s32.totalorder %s23, %s26
      %p32 = scmp.eq.s32.totalorder %s13, 0
      %p33 = por %p31, %p32
      %p34 = scmp.ne.s32.totalorder %s23, %s26
      %p35 = scmp.eq.s32.totalorder %s18, 1
      %p36 = por %p34, %p35
      %p37 = scmp.ne.s32.totalorder %s26, %s27
      %p38 = scmp.eq.s32.totalorder %s18, 0
      %p39 = por %p37, %p38
      %p40 = scmp.ne.s32.totalorder %s26, %s27
      %p41 = scmp.eq.s32.totalorder %s19, 1
      %p42 = por %p40, %p41
      %p44 = scmp.ne.s32.totalorder %s27, %s43
      %p45 = scmp.eq.s32.totalorder %s19, 0
      %p46 = por %p44, %p45
      %s48 = sadd.s32 %s47, 1
      %p51 = scmp.eq.s32.totalorder %s13, 1
      %p52 = scmp.ne.s32.totalorder %s47, %s49
      %p53 = scmp.eq.s32.totalorder %s13, 0
      %p54 = por %p52, %p53
      %p55 = scmp.ne.s32.totalorder %s47, %s49
      %p56 = scmp.eq.s32.totalorder %s18, 1
      %p57 = por %p55, %p56
      %p58 = scmp.ne.s32.totalorder %s49, %s50
      %p59 = scmp.eq.s32.totalorder %s18, 0
      %p60 = por %p58, %p59
      %p61 = scmp.ne.s32.totalorder %s49, %s50
      %p62 = scmp.eq.s32.totalorder %s19, 1
      %p63 = por %p61, %p62
      %p65 = scmp.ne.s32.totalorder %s50, %s64
      %p66 = scmp.eq.s32.totalorder %s19, 0
      %p67 = por %p65, %p66
      %s69 = sadd.s32 %s68, 1
      %p72 = scmp.eq.s32.totalorder %s13, 1
      %p73 = scmp.ne.s32.totalorder %s68, %s70
      %p74 = scmp.eq.s32.totalorder %s13, 0
      %p75 = por %p73, %p74
      %p76 = scmp.ne.s32.totalorder %s68, %s70
      %p77 = scmp.eq.s32.totalorder %s18, 1
      %p78 = por %p76, %p77
      %p79 = scmp.ne.s32.totalorder %s70, %s71
      %p80 = scmp.eq.s32.totalorder %s18, 0
      %p81 = por %p79, %p80
      %p82 = scmp.ne.s32.totalorder %s70, %s71
      %p83 = scmp.eq.s32.totalorder %s19, 1
      %p84 = por %p82, %p83
      %p86 = scmp.ne.s32.totalorder %s71, %s85
      %p87 = scmp.eq.s32.totalorder %s19, 0
      %p88 = por %p86, %p87
      %s90 = sadd.s32 %s89, 1
      %p93 = scmp.eq.s32.totalorder %s13, 1
      %p94 = scmp.ne.s32.totalorder %s89, %s91
      %p95 = scmp.eq.s32.totalorder %s13, 0
      %p96 = por %p94, %p95
      %p97 = scmp.ne.s32.totalorder %s89, %s91
      %p98 = scmp.eq.s32.totalorder %s18, 1
      %p99 = por %p97, %p98
      %p100 = scmp.ne.s32.totalorder %s91, %s92
      %p101 = scmp.eq.s32.totalorder %s18, 0
      %p102 = por %p100, %p101
      %p103 = scmp.ne.s32.totalorder %s91, %s92
      %p104 = scmp.eq.s32.totalorder %s19, 1
      %p105 = por %p103, %p104
      %p107 = scmp.ne.s32.totalorder %s92, %s106
      %p108 = scmp.eq.s32.totalorder %s19, 0
      %p109 = por %p107, %p108
      %s111 = sadd.s32 %s110, 1
      %p114 = scmp.eq.s32.totalorder %s13, 1
      %p115 = scmp.ne.s32.totalorder %s110, %s112
      %p116 = scmp.eq.s32.totalorder %s13, 0
      %p117 = por %p115, %p116
      %p118 = scmp.ne.s32.totalorder %s110, %s112
      %p119 = scmp.eq.s32.totalorder %s18, 1
      %p120 = por %p118, %p119
      %p121 = scmp.ne.s32.totalorder %s112, %s113
      %p122 = scmp.eq.s32.totalorder %s18, 0
      %p123 = por %p121, %p122
      %p124 = scmp.ne.s32.totalorder %s112, %s113
      %p125 = scmp.eq.s32.totalorder %s19, 1
      %p126 = por %p124, %p125
      %p128 = scmp.ne.s32.totalorder %s113, %s127
      %p129 = scmp.eq.s32.totalorder %s19, 0
      %p130 = por %p128, %p129
      %s132 = sadd.s32 %s131, 1
      %p135 = scmp.eq.s32.totalorder %s13, 1
      %p136 = scmp.ne.s32.totalorder %s131, %s133
      %p137 = scmp.eq.s32.totalorder %s13, 0
      %p138 = por %p136, %p137
      %p139 = scmp.ne.s32.totalorder %s131, %s133
      %p140 = scmp.eq.s32.totalorder %s18, 1
      %p141 = por %p139, %p140
      %p142 = scmp.ne.s32.totalorder %s133, %s134
      %p143 = scmp.eq.s32.totalorder %s18, 0
      %p144 = por %p142, %p143
      %p145 = scmp.ne.s32.totalorder %s133, %s134
      %p146 = scmp.eq.s32.totalorder %s19, 1
      %p147 = por %p145, %p146
      %p149 = scmp.ne.s32.totalorder %s134, %s148
      %p150 = scmp.eq.s32.totalorder %s19, 0
      %p151 = por %p149, %p150
      %s153 = sadd.s32 %s152, 1
      %p156 = scmp.eq.s32.totalorder %s13, 1
      %p157 = scmp.ne.s32.totalorder %s152, %s154
      %p158 = scmp.eq.s32.totalorder %s13, 0
      %p159 = por %p157, %p158
      %p160 = scmp.ne.s32.totalorder %s152, %s154
      %p161 = scmp.eq.s32.totalorder %s18, 1
      %p162 = por %p160, %p161
      %p163 = scmp.ne.s32.totalorder %s154, %s155
      %p164 = scmp.eq.s32.totalorder %s18, 0
      %p165 = por %p163, %p164
      %p166 = scmp.ne.s32.totalorder %s154, %s155
      %p167 = scmp.eq.s32.totalorder %s19, 1
      %p168 = por %p166, %p167
      %p170 = scmp.ne.s32.totalorder %s155, %s169
      %p171 = scmp.eq.s32.totalorder %s19, 0
      %p172 = por %p170, %p171
      %s173 = ssub.s32 %s13, %s20
      %p174 = scmp.eq.s32.totalorder %s173, 0
      %s176 = sadd.s32 %s175, 1
      %s177 = scalar_select %p174, %s175, %s176
      %p180 = pneg %p174
      %p181 = scmp.eq.s32.totalorder %s13, 1
      %p182 = por %p180, %p181
      %p183 = scmp.ne.s32.totalorder %s175, %s178
      %p184 = scmp.eq.s32.totalorder %s13, 0
      %p185 = por %p183, %p184
      %p186 = scmp.ne.s32.totalorder %s175, %s178
      %p187 = scmp.eq.s32.totalorder %s18, 1
      %p188 = por %p186, %p187
      %p189 = scmp.ne.s32.totalorder %s178, %s179
      %p190 = scmp.eq.s32.totalorder %s18, 0
      %p191 = por %p189, %p190
      %p192 = scmp.ne.s32.totalorder %s178, %s179
      %p193 = scmp.eq.s32.totalorder %s19, 1
      %p194 = por %p192, %p193
      %p196 = scmp.ne.s32.totalorder %s179, %s195
      %p197 = scmp.eq.s32.totalorder %s19, 0
      %p198 = por %p196, %p197
      %p199 = scmp.le.s32.totalorder 1, %s13
      %p200 = scmp.lt.s32.totalorder %s13, 3
      %p201 = pnand %p199, %p200
      %p202 = pneg %p201
      // Predicated region
      $region9: #{_mlp_forward_impl.1} parent=5 // pred_check
        _
      $region10: #{_mlp_forward_impl.1} parent=5 // pred_check_branch
        %204 = sbr.rel (%p201) target = $region12
      $region11: #{_mlp_forward_impl.1} parent=5 // pred_region
        %s205 = ssub.s32 %s13, 1
        // Predicated region
        $region13: #{_mlp_forward_impl.1} parent=11 // pred_check
          %p206 = pneg %p60
        $region14: #{_mlp_forward_impl.1} parent=11 // pred_check_branch
          %208 = sbr.rel (%p206) target = $region16
        $region15: #{_mlp_forward_impl.1} parent=11 // pred_region
          _
        $region16: #{_mlp_forward_impl.1} parent=11 // pred_fallthru
          _
        // Predicated region
        $region17: #{_mlp_forward_impl.1} parent=11 // pred_check
          %p209 = pneg %p81
        $region18: #{_mlp_forward_impl.1} parent=11 // pred_check_branch
          %211 = sbr.rel (%p209) target = $region20
        $region19: #{_mlp_forward_impl.1} parent=11 // pred_region
          _
        $region20: #{_mlp_forward_impl.1} parent=11 // pred_fallthru
          _
        // Predicated region
        $region21: #{_mlp_forward_impl.1} parent=11 // pred_check
          %p212 = pneg %p102
        $region22: #{_mlp_forward_impl.1} parent=11 // pred_check_branch
          %214 = sbr.rel (%p212) target = $region24
        $region23: #{_mlp_forward_impl.1} parent=11 // pred_region
          _
        $region24: #{_mlp_forward_impl.1} parent=11 // pred_fallthru
          _
        // Predicated region
        $region25: #{_mlp_forward_impl.1} parent=11 // pred_check
          %p215 = pneg %p123
        $region26: #{_mlp_forward_impl.1} parent=11 // pred_check_branch
          %217 = sbr.rel (%p215) target = $region28
        $region27: #{_mlp_forward_impl.1} parent=11 // pred_region
          _
        $region28: #{_mlp_forward_impl.1} parent=11 // pred_fallthru
          _
        // Predicated region
        $region29: #{_mlp_forward_impl.1} parent=11 // pred_check
          %p218 = pneg %p144
        $region30: #{_mlp_forward_impl.1} parent=11 // pred_check_branch
          %220 = sbr.rel (%p218) target = $region32
        $region31: #{_mlp_forward_impl.1} parent=11 // pred_region
          _
        $region32: #{_mlp_forward_impl.1} parent=11 // pred_fallthru
          _
        // Predicated region
        $region33: #{_mlp_forward_impl.1} parent=11 // pred_check
          %p221 = pneg %p165
        $region34: #{_mlp_forward_impl.1} parent=11 // pred_check_branch
          %223 = sbr.rel (%p221) target = $region36
        $region35: #{_mlp_forward_impl.1} parent=11 // pred_region
          _
        $region36: #{_mlp_forward_impl.1} parent=11 // pred_fallthru
          _
      $region12: #{_mlp_forward_impl.1} parent=5 // pred_fallthru
        _
      %p224 = scmp.lt.s32.totalorder %s13, 2
      // Predicated region
      $region37: #{_mlp_forward_impl.1} parent=5 // pred_check
        %p225 = pneg %p224
      $region38: #{_mlp_forward_impl.1} parent=5 // pred_check_branch
        %227 = sbr.rel (%p225) target = $region40
      $region39: #{_mlp_forward_impl.1} parent=5 // pred_region
        // Predicated region
        $region41: #{_mlp_forward_impl.1} parent=39 // pred_check
          %p228 = pneg %p33
        $region42: #{_mlp_forward_impl.1} parent=39 // pred_check_branch
          %230 = sbr.rel (%p228) target = $region44
        $region43: #{_mlp_forward_impl.1} parent=39 // pred_region
          %s231 = smul.u32 20, %s13
          %s232 = ssub.s32 38, %s231
          %p233 = scmp.lt.s32.totalorder %s232, 20
          %s234 = scalar_select %p233, %s232, 20
          %s235 = smul.u32 8, %s234
          %p236 = scmp.lt.s32.totalorder %s231, 37
          %s237 = scalar_select %p236, %s231, 37
          %s238 = smul.addr %s237, 8
          %s239 = scalar_lea.vmem %s0, %s238
          %s240 = smul.u32 20, %s13
          %s241 = ssub.s32 38, %s240
          %p242 = scmp.lt.s32.totalorder %s241, 20
          %s243 = scalar_select %p242, %s241, 20
          %s244 = smul.u32 8, %s243
        $region44: #{_mlp_forward_impl.1} parent=39 // pred_fallthru
          _
      $region40: #{_mlp_forward_impl.1} parent=5 // pred_fallthru
        _
      %p245 = scmp.le.s32.totalorder 1, %s13
      %p246 = scmp.lt.s32.totalorder %s13, 3
      %p247 = pnand %p245, %p246
      %p248 = pneg %p247
      // Predicated region
      $region45: #{_mlp_forward_impl.1} parent=5 // pred_check
        _
      $region46: #{_mlp_forward_impl.1} parent=5 // pred_check_branch
        %250 = sbr.rel (%p247) target = $region48
      $region47: #{_mlp_forward_impl.1} parent=5 // pred_region
        %s251 = ssub.s32 %s13, 1
        %s252 = smul.u32 20, %s18
        %s253 = ssub.s32 38, %s252
        %p254 = scmp.lt.s32.totalorder %s253, 20
        %s255 = scalar_select %p254, %s253, 20
        %s256 = smul.u32 8, %s255
        %p257 = scmp.lt.s32.totalorder %s252, 37
        %s258 = scalar_select %p257, %s252, 37
        %s259 = smul.addr %s258, 8
        %s260 = scalar_lea.vmem %s0, %s259
        %p261 = pneg %p39
        %p262 = pneg %p36
        %p263 = pneg %p60
        %p264 = pneg %p57
        %p265 = pneg %p81
        %p266 = pneg %p78
        %p267 = pneg %p102
        %p268 = pneg %p99
        %p269 = pneg %p123
        %p270 = pneg %p120
        %p271 = pneg %p144
        %p272 = pneg %p141
        %p273 = pneg %p165
        %p274 = pneg %p162
        %p275 = pneg %p191
        %p276 = pneg %p188
        %s277 = sand.u32 %s178, 1
        %s278 = sand.u32 %s178, 1
        %s279 = smul.addr %s278, 160
        %s280 = scalar_lea.vmem [#allocation2], %s279
        %s281 = smul.u32 20, %s18
        %s282 = ssub.s32 38, %s281
        %p283 = scmp.lt.s32.totalorder %s282, 20
        %s284 = scalar_select %p283, %s282, 20
        %s285 = smul.u32 8, %s284
        %p286 = scmp.lt.s32.totalorder %s281, 37
        %s287 = scalar_select %p286, %s281, 37
        %s288 = smul.addr %s287, 8
        %s289 = scalar_lea.vmem %s0, %s288
        %s290 = smul.u32 20, %s18
        %s291 = ssub.s32 38, %s290
        %p292 = scmp.lt.s32.totalorder %s291, 20
        %s293 = scalar_select %p292, %s291, 20
        %s294 = smul.u32 8, %s293
        %s295 = smul.u32 20, %s18
        %s296 = ssub.s32 38, %s295
        %p297 = scmp.lt.s32.totalorder %s296, 20
        %s298 = scalar_select %p297, %s296, 20
        %s299 = smul.u32 8, %s298
        %v300 = vld [vmem:[%s289] sm:$0xff]
        %v301 = vld [vmem:[%s289 + $0x8] sm:$0xff]
        %v302 = vld [vmem:[%s289 + $0x10] sm:$0xff]
        %v303 = vld [vmem:[%s289 + $0x18] sm:$0xff]
        %v304 = vld [vmem:[%s289 + $0x20] sm:$0xff]
        %v305 = vld [vmem:[%s289 + $0x28] sm:$0xff]
        %v306 = vld [vmem:[%s289 + $0x30] sm:$0xff]
        %v307 = vld [vmem:[%s289 + $0x38] sm:$0xff]
        %v308 = vld [vmem:[%s289 + $0x40] sm:$0xff]
        %v309 = vld [vmem:[%s289 + $0x48] sm:$0xff]
        %v310 = vld [vmem:[%s289 + $0x50] sm:$0xff]
        %v311 = vld [vmem:[%s289 + $0x58] sm:$0xff]
        %v312 = vld [vmem:[%s289 + $0x60] sm:$0xff]
        %v313 = vld [vmem:[%s289 + $0x68] sm:$0xff]
        %v314 = vld [vmem:[%s289 + $0x70] sm:$0xff]
        %v315 = vld [vmem:[%s289 + $0x78] sm:$0xff]
        %v316 = vld [vmem:[%s289 + $0x80] sm:$0xff]
        %v317 = vld [vmem:[%s289 + $0x88] sm:$0xff]
        %v318 = vld [vmem:[%s289 + $0x90] sm:$0xff]
        %v319 = vld [vmem:[%s289 + $0x98] sm:$0xff]
        %v320 = vld [vmem:[%s1] sm:$0xf]
        %v321 = vld [vmem:[%s1 + $0x4] sm:$0xf]
        %v322 = vld [vmem:[%s1 + $0x8] sm:$0xf]
        %v323 = vld [vmem:[%s1 + $0xc] sm:$0xf]
        %v324 = vld [vmem:[%s1 + $0x10] sm:$0xf]
        %v325 = vld [vmem:[%s1 + $0x14] sm:$0xf]
        %v326 = vld [vmem:[%s1 + $0x18] sm:$0xf]
        %v327 = vld [vmem:[%s1 + $0x1c] sm:$0xf]
        %v328 = vld [vmem:[%s1 + $0x20] sm:$0xf]
        %v329 = vld [vmem:[%s1 + $0x24] sm:$0xf]
        %v330 = vld [vmem:[%s1 + $0x28] sm:$0xf]
        %v331 = vld [vmem:[%s1 + $0x2c] sm:$0xf]
        %v332 = vld [vmem:[%s1 + $0x30] sm:$0xf]
        %v333 = vld [vmem:[%s1 + $0x34] sm:$0xf]
        %v334 = vld [vmem:[%s1 + $0x38] sm:$0xf]
        %v335 = vld [vmem:[%s1 + $0x3c] sm:$0xf]
        %v336 = vld [vmem:[%s2] sm:$0x1]
        %v337 = vpack.c.bf16 %v301, %v300
        %v338 = vpack.c.bf16 %v303, %v302
        %v339 = vpack.c.bf16 %v305, %v304
        %v340 = vpack.c.bf16 %v307, %v306
        %v341 = vpack.c.bf16 %v309, %v308
        %v342 = vpack.c.bf16 %v311, %v310
        %v343 = vpack.c.bf16 %v313, %v312
        %v344 = vpack.c.bf16 %v315, %v314
        %v345 = vpack.c.bf16 %v317, %v316
        %v346 = vpack.c.bf16 %v319, %v318
        %v348 = vperm.slane %v336, 0
        %v366 = vunpack.c.l.b16 %v320
        %v367 = vunpack.c.l.b16 %v321
        %v368 = vunpack.c.l.b16 %v322
        %v369 = vunpack.c.l.b16 %v323
        %v370 = vunpack.c.l.b16 %v324
        %v371 = vunpack.c.l.b16 %v325
        %v372 = vunpack.c.l.b16 %v326
        %v373 = vunpack.c.l.b16 %v327
        %v374 = vunpack.c.l.b16 %v328
        %v375 = vunpack.c.l.b16 %v329
        %v376 = vunpack.c.l.b16 %v330
        %v377 = vunpack.c.l.b16 %v331
        %v378 = vunpack.c.l.b16 %v332
        %v379 = vunpack.c.l.b16 %v333
        %v380 = vunpack.c.l.b16 %v334
        %v381 = vunpack.c.l.b16 %v335
        %v382 = vpack.c.b16 %v367, %v366
        %v383 = vpack.c.b16 %v369, %v368
        %v384 = vpack.c.b16 %v371, %v370
        %v385 = vpack.c.b16 %v373, %v372
        %v386 = vpack.c.b16 %v375, %v374
        %v387 = vpack.c.b16 %v377, %v376
        %v388 = vpack.c.b16 %v379, %v378
        %v389 = vpack.c.b16 %v381, %v380
        %398 = vmatpush.bf16.msra.mxu0 %v389
        %399 = vmatpush.bf16.msra.mxu0 %v388
        %400 = vmatpush.bf16.msra.mxu0 %v387
        %401 = vmatpush.bf16.msra.mxu0 %v386
        %402 = vmatpush.bf16.msra.mxu0 %v385
        %403 = vmatpush.bf16.msra.mxu0 %v384
        %404 = vmatpush.bf16.msra.mxu0 %v383
        %405 = vmatpush.bf16.msra.mxu0 %v382
        %406 = vmatmul.bf16.gmra.mxu0 %v337
        %v407 = vpop.f32.mrf.mxu0
        %v408 = vadd.f32 %v348, %v407
        %v409 = vpop.f32.mrf.mxu0
        %v410 = vadd.f32 %v348, %v409
        %411 = vmatmul.bf16.gmra.mxu0 %v338
        %v412 = vpop.f32.mrf.mxu0
        %v413 = vadd.f32 %v348, %v412
        %v414 = vpop.f32.mrf.mxu0
        %v415 = vadd.f32 %v348, %v414
        %416 = vmatmul.bf16.gmra.mxu0 %v339
        %v417 = vpop.f32.mrf.mxu0
        %v418 = vadd.f32 %v348, %v417
        %v419 = vpop.f32.mrf.mxu0
        %v420 = vadd.f32 %v348, %v419
        %421 = vmatmul.bf16.gmra.mxu0 %v340
        %v422 = vpop.f32.mrf.mxu0
        %v423 = vadd.f32 %v348, %v422
        %v424 = vpop.f32.mrf.mxu0
        %v425 = vadd.f32 %v348, %v424
        %426 = vmatmul.bf16.gmra.mxu0 %v341
        %v427 = vpop.f32.mrf.mxu0
        %v428 = vadd.f32 %v348, %v427
        %v429 = vpop.f32.mrf.mxu0
        %v430 = vadd.f32 %v348, %v429
        %431 = vmatmul.bf16.gmra.mxu0 %v342
        %v432 = vpop.f32.mrf.mxu0
        %v433 = vadd.f32 %v348, %v432
        %v434 = vpop.f32.mrf.mxu0
        %v435 = vadd.f32 %v348, %v434
        %436 = vmatmul.bf16.gmra.mxu0 %v343
        %v437 = vpop.f32.mrf.mxu0
        %v438 = vadd.f32 %v348, %v437
        %v439 = vpop.f32.mrf.mxu0
        %v440 = vadd.f32 %v348, %v439
        %441 = vmatmul.bf16.gmra.mxu0 %v344
        %v442 = vpop.f32.mrf.mxu0
        %v443 = vadd.f32 %v348, %v442
        %v444 = vpop.f32.mrf.mxu0
        %v445 = vadd.f32 %v348, %v444
        %446 = vmatmul.bf16.gmra.mxu0 %v345
        %v447 = vpop.f32.mrf.mxu0
        %v448 = vadd.f32 %v348, %v447
        %v449 = vpop.f32.mrf.mxu0
        %v450 = vadd.f32 %v348, %v449
        %451 = vmatmul.bf16.gmra.mxu0 %v346
        %v452 = vpop.f32.mrf.mxu0
        %v453 = vadd.f32 %v348, %v452
        %v454 = vpop.f32.mrf.mxu0
        %v455 = vadd.f32 %v348, %v454
        %456 = vdwg.mxu0
        %v457 = vmax.f32 %v408, 0.0
        %v458 = vmax.f32 %v410, 0.0
        %v459 = vmax.f32 %v413, 0.0
        %v460 = vmax.f32 %v415, 0.0
        %v461 = vmax.f32 %v418, 0.0
        %v462 = vmax.f32 %v420, 0.0
        %v463 = vmax.f32 %v423, 0.0
        %v464 = vmax.f32 %v425, 0.0
        %v465 = vmax.f32 %v428, 0.0
        %v466 = vmax.f32 %v430, 0.0
        %v467 = vmax.f32 %v433, 0.0
        %v468 = vmax.f32 %v435, 0.0
        %v469 = vmax.f32 %v438, 0.0
        %v470 = vmax.f32 %v440, 0.0
        %v471 = vmax.f32 %v443, 0.0
        %v472 = vmax.f32 %v445, 0.0
        %v473 = vmax.f32 %v448, 0.0
        %v474 = vmax.f32 %v450, 0.0
        %v475 = vmax.f32 %v453, 0.0
        %v476 = vmax.f32 %v455, 0.0
        %v477 = vld [vmem:[%s3] sm:$0xf]
        %v478 = vld [vmem:[%s3 + $0x4] sm:$0xf]
        %v479 = vld [vmem:[%s3 + $0x8] sm:$0xf]
        %v480 = vld [vmem:[%s3 + $0xc] sm:$0xf]
        %v481 = vld [vmem:[%s3 + $0x10] sm:$0xf]
        %v482 = vld [vmem:[%s3 + $0x14] sm:$0xf]
        %v483 = vld [vmem:[%s3 + $0x18] sm:$0xf]
        %v484 = vld [vmem:[%s3 + $0x1c] sm:$0xf]
        %v485 = vld [vmem:[%s3 + $0x20] sm:$0xf]
        %v486 = vld [vmem:[%s3 + $0x24] sm:$0xf]
        %v487 = vld [vmem:[%s3 + $0x28] sm:$0xf]
        %v488 = vld [vmem:[%s3 + $0x2c] sm:$0xf]
        %v489 = vld [vmem:[%s3 + $0x30] sm:$0xf]
        %v490 = vld [vmem:[%s3 + $0x34] sm:$0xf]
        %v491 = vld [vmem:[%s3 + $0x38] sm:$0xf]
        %v492 = vld [vmem:[%s3 + $0x3c] sm:$0xf]
        %v493 = vld [vmem:[%s4] sm:$0x1]
        %v494 = vpack.c.bf16 %v458, %v457
        %v495 = vpack.c.bf16 %v460, %v459
        %v496 = vpack.c.bf16 %v462, %v461
        %v497 = vpack.c.bf16 %v464, %v463
        %v498 = vpack.c.bf16 %v466, %v465
        %v499 = vpack.c.bf16 %v468, %v467
        %v500 = vpack.c.bf16 %v470, %v469
        %v501 = vpack.c.bf16 %v472, %v471
        %v502 = vpack.c.bf16 %v474, %v473
        %v503 = vpack.c.bf16 %v476, %v475
        %v505 = vperm.slane %v493, 0
        %v523 = vunpack.c.l.b16 %v477
        %v524 = vunpack.c.l.b16 %v478
        %v525 = vunpack.c.l.b16 %v479
        %v526 = vunpack.c.l.b16 %v480
        %v527 = vunpack.c.l.b16 %v481
        %v528 = vunpack.c.l.b16 %v482
        %v529 = vunpack.c.l.b16 %v483
        %v530 = vunpack.c.l.b16 %v484
        %v531 = vunpack.c.l.b16 %v485
        %v532 = vunpack.c.l.b16 %v486
        %v533 = vunpack.c.l.b16 %v487
        %v534 = vunpack.c.l.b16 %v488
        %v535 = vunpack.c.l.b16 %v489
        %v536 = vunpack.c.l.b16 %v490
        %v537 = vunpack.c.l.b16 %v491
        %v538 = vunpack.c.l.b16 %v492
        %v539 = vpack.c.b16 %v524, %v523
        %v540 = vpack.c.b16 %v526, %v525
        %v541 = vpack.c.b16 %v528, %v527
        %v542 = vpack.c.b16 %v530, %v529
        %v543 = vpack.c.b16 %v532, %v531
        %v544 = vpack.c.b16 %v534, %v533
        %v545 = vpack.c.b16 %v536, %v535
        %v546 = vpack.c.b16 %v538, %v537
        %555 = vmatpush.bf16.msra.mxu0 %v546
        %556 = vmatpush.bf16.msra.mxu0 %v545
        %557 = vmatpush.bf16.msra.mxu0 %v544
        %558 = vmatpush.bf16.msra.mxu0 %v543
        %559 = vmatpush.bf16.msra.mxu0 %v542
        %560 = vmatpush.bf16.msra.mxu0 %v541
        %561 = vmatpush.bf16.msra.mxu0 %v540
        %562 = vmatpush.bf16.msra.mxu0 %v539
        %563 = vmatmul.bf16.gmra.mxu0 %v494
        %v564 = vpop.f32.mrf.mxu0
        %v565 = vadd.f32 %v505, %v564
        %v566 = vpop.f32.mrf.mxu0
        %v567 = vadd.f32 %v505, %v566
        %568 = vmatmul.bf16.gmra.mxu0 %v495
        %v569 = vpop.f32.mrf.mxu0
        %v570 = vadd.f32 %v505, %v569
        %v571 = vpop.f32.mrf.mxu0
        %v572 = vadd.f32 %v505, %v571
        %573 = vmatmul.bf16.gmra.mxu0 %v496
        %v574 = vpop.f32.mrf.mxu0
        %v575 = vadd.f32 %v505, %v574
        %v576 = vpop.f32.mrf.mxu0
        %v577 = vadd.f32 %v505, %v576
        %578 = vmatmul.bf16.gmra.mxu0 %v497
        %v579 = vpop.f32.mrf.mxu0
        %v580 = vadd.f32 %v505, %v579
        %v581 = vpop.f32.mrf.mxu0
        %v582 = vadd.f32 %v505, %v581
        %583 = vmatmul.bf16.gmra.mxu0 %v498
        %v584 = vpop.f32.mrf.mxu0
        %v585 = vadd.f32 %v505, %v584
        %v586 = vpop.f32.mrf.mxu0
        %v587 = vadd.f32 %v505, %v586
        %588 = vmatmul.bf16.gmra.mxu0 %v499
        %v589 = vpop.f32.mrf.mxu0
        %v590 = vadd.f32 %v505, %v589
        %v591 = vpop.f32.mrf.mxu0
        %v592 = vadd.f32 %v505, %v591
        %593 = vmatmul.bf16.gmra.mxu0 %v500
        %v594 = vpop.f32.mrf.mxu0
        %v595 = vadd.f32 %v505, %v594
        %v596 = vpop.f32.mrf.mxu0
        %v597 = vadd.f32 %v505, %v596
        %598 = vmatmul.bf16.gmra.mxu0 %v501
        %v599 = vpop.f32.mrf.mxu0
        %v600 = vadd.f32 %v505, %v599
        %v601 = vpop.f32.mrf.mxu0
        %v602 = vadd.f32 %v505, %v601
        %603 = vmatmul.bf16.gmra.mxu0 %v502
        %v604 = vpop.f32.mrf.mxu0
        %v605 = vadd.f32 %v505, %v604
        %v606 = vpop.f32.mrf.mxu0
        %v607 = vadd.f32 %v505, %v606
        %608 = vmatmul.bf16.gmra.mxu0 %v503
        %v609 = vpop.f32.mrf.mxu0
        %v610 = vadd.f32 %v505, %v609
        %v611 = vpop.f32.mrf.mxu0
        %v612 = vadd.f32 %v505, %v611
        %613 = vdwg.mxu0
        %v614 = vmax.f32 %v565, 0.0
        %v615 = vmax.f32 %v567, 0.0
        %v616 = vmax.f32 %v570, 0.0
        %v617 = vmax.f32 %v572, 0.0
        %v618 = vmax.f32 %v575, 0.0
        %v619 = vmax.f32 %v577, 0.0
        %v620 = vmax.f32 %v580, 0.0
        %v621 = vmax.f32 %v582, 0.0
        %v622 = vmax.f32 %v585, 0.0
        %v623 = vmax.f32 %v587, 0.0
        %v624 = vmax.f32 %v590, 0.0
        %v625 = vmax.f32 %v592, 0.0
        %v626 = vmax.f32 %v595, 0.0
        %v627 = vmax.f32 %v597, 0.0
        %v628 = vmax.f32 %v600, 0.0
        %v629 = vmax.f32 %v602, 0.0
        %v630 = vmax.f32 %v605, 0.0
        %v631 = vmax.f32 %v607, 0.0
        %v632 = vmax.f32 %v610, 0.0
        %v633 = vmax.f32 %v612, 0.0
        %v634 = vld [vmem:[%s5] sm:$0xf]
        %v635 = vld [vmem:[%s5 + $0x4] sm:$0xf]
        %v636 = vld [vmem:[%s5 + $0x8] sm:$0xf]
        %v637 = vld [vmem:[%s5 + $0xc] sm:$0xf]
        %v638 = vld [vmem:[%s5 + $0x10] sm:$0xf]
        %v639 = vld [vmem:[%s5 + $0x14] sm:$0xf]
        %v640 = vld [vmem:[%s5 + $0x18] sm:$0xf]
        %v641 = vld [vmem:[%s5 + $0x1c] sm:$0xf]
        %v642 = vld [vmem:[%s5 + $0x20] sm:$0xf]
        %v643 = vld [vmem:[%s5 + $0x24] sm:$0xf]
        %v644 = vld [vmem:[%s5 + $0x28] sm:$0xf]
        %v645 = vld [vmem:[%s5 + $0x2c] sm:$0xf]
        %v646 = vld [vmem:[%s5 + $0x30] sm:$0xf]
        %v647 = vld [vmem:[%s5 + $0x34] sm:$0xf]
        %v648 = vld [vmem:[%s5 + $0x38] sm:$0xf]
        %v649 = vld [vmem:[%s5 + $0x3c] sm:$0xf]
        %v650 = vld [vmem:[%s6] sm:$0x1]
        %v651 = vpack.c.bf16 %v615, %v614
        %v652 = vpack.c.bf16 %v617, %v616
        %v653 = vpack.c.bf16 %v619, %v618
        %v654 = vpack.c.bf16 %v621, %v620
        %v655 = vpack.c.bf16 %v623, %v622
        %v656 = vpack.c.bf16 %v625, %v624
        %v657 = vpack.c.bf16 %v627, %v626
        %v658 = vpack.c.bf16 %v629, %v628
        %v659 = vpack.c.bf16 %v631, %v630
        %v660 = vpack.c.bf16 %v633, %v632
        %v662 = vperm.slane %v650, 0
        %v680 = vunpack.c.l.b16 %v634
        %v681 = vunpack.c.l.b16 %v635
        %v682 = vunpack.c.l.b16 %v636
        %v683 = vunpack.c.l.b16 %v637
        %v684 = vunpack.c.l.b16 %v638
        %v685 = vunpack.c.l.b16 %v639
        %v686 = vunpack.c.l.b16 %v640
        %v687 = vunpack.c.l.b16 %v641
        %v688 = vunpack.c.l.b16 %v642
        %v689 = vunpack.c.l.b16 %v643
        %v690 = vunpack.c.l.b16 %v644
        %v691 = vunpack.c.l.b16 %v645
        %v692 = vunpack.c.l.b16 %v646
        %v693 = vunpack.c.l.b16 %v647
        %v694 = vunpack.c.l.b16 %v648
        %v695 = vunpack.c.l.b16 %v649
        %v696 = vpack.c.b16 %v681, %v680
        %v697 = vpack.c.b16 %v683, %v682
        %v698 = vpack.c.b16 %v685, %v684
        %v699 = vpack.c.b16 %v687, %v686
        %v700 = vpack.c.b16 %v689, %v688
        %v701 = vpack.c.b16 %v691, %v690
        %v702 = vpack.c.b16 %v693, %v692
        %v703 = vpack.c.b16 %v695, %v694
        %712 = vmatpush.bf16.msra.mxu0 %v703
        %713 = vmatpush.bf16.msra.mxu0 %v702
        %714 = vmatpush.bf16.msra.mxu0 %v701
        %715 = vmatpush.bf16.msra.mxu0 %v700
        %716 = vmatpush.bf16.msra.mxu0 %v699
        %717 = vmatpush.bf16.msra.mxu0 %v698
        %718 = vmatpush.bf16.msra.mxu0 %v697
        %719 = vmatpush.bf16.msra.mxu0 %v696
        %720 = vmatmul.bf16.gmra.mxu0 %v651
        %v721 = vpop.f32.mrf.mxu0
        %v722 = vadd.f32 %v662, %v721
        %v723 = vpop.f32.mrf.mxu0
        %v724 = vadd.f32 %v662, %v723
        %725 = vmatmul.bf16.gmra.mxu0 %v652
        %v726 = vpop.f32.mrf.mxu0
        %v727 = vadd.f32 %v662, %v726
        %v728 = vpop.f32.mrf.mxu0
        %v729 = vadd.f32 %v662, %v728
        %730 = vmatmul.bf16.gmra.mxu0 %v653
        %v731 = vpop.f32.mrf.mxu0
        %v732 = vadd.f32 %v662, %v731
        %v733 = vpop.f32.mrf.mxu0
        %v734 = vadd.f32 %v662, %v733
        %735 = vmatmul.bf16.gmra.mxu0 %v654
        %v736 = vpop.f32.mrf.mxu0
        %v737 = vadd.f32 %v662, %v736
        %v738 = vpop.f32.mrf.mxu0
        %v739 = vadd.f32 %v662, %v738
        %740 = vmatmul.bf16.gmra.mxu0 %v655
        %v741 = vpop.f32.mrf.mxu0
        %v742 = vadd.f32 %v662, %v741
        %v743 = vpop.f32.mrf.mxu0
        %v744 = vadd.f32 %v662, %v743
        %745 = vmatmul.bf16.gmra.mxu0 %v656
        %v746 = vpop.f32.mrf.mxu0
        %v747 = vadd.f32 %v662, %v746
        %v748 = vpop.f32.mrf.mxu0
        %v749 = vadd.f32 %v662, %v748
        %750 = vmatmul.bf16.gmra.mxu0 %v657
        %v751 = vpop.f32.mrf.mxu0
        %v752 = vadd.f32 %v662, %v751
        %v753 = vpop.f32.mrf.mxu0
        %v754 = vadd.f32 %v662, %v753
        %755 = vmatmul.bf16.gmra.mxu0 %v658
        %v756 = vpop.f32.mrf.mxu0
        %v757 = vadd.f32 %v662, %v756
        %v758 = vpop.f32.mrf.mxu0
        %v759 = vadd.f32 %v662, %v758
        %760 = vmatmul.bf16.gmra.mxu0 %v659
        %v761 = vpop.f32.mrf.mxu0
        %v762 = vadd.f32 %v662, %v761
        %v763 = vpop.f32.mrf.mxu0
        %v764 = vadd.f32 %v662, %v763
        %765 = vmatmul.bf16.gmra.mxu0 %v660
        %v766 = vpop.f32.mrf.mxu0
        %v767 = vadd.f32 %v662, %v766
        %v768 = vpop.f32.mrf.mxu0
        %v769 = vadd.f32 %v662, %v768
        %770 = vdwg.mxu0
        %771 = vst [vmem:[%s280] sm:$0xff] %v722
        %772 = vst [vmem:[%s280 + $0x8] sm:$0xff] %v724
        %773 = vst [vmem:[%s280 + $0x10] sm:$0xff] %v727
        %774 = vst [vmem:[%s280 + $0x18] sm:$0xff] %v729
        %775 = vst [vmem:[%s280 + $0x20] sm:$0xff] %v732
        %776 = vst [vmem:[%s280 + $0x28] sm:$0xff] %v734
        %777 = vst [vmem:[%s280 + $0x30] sm:$0xff] %v737
        %778 = vst [vmem:[%s280 + $0x38] sm:$0xff] %v739
        %779 = vst [vmem:[%s280 + $0x40] sm:$0xff] %v742
        %780 = vst [vmem:[%s280 + $0x48] sm:$0xff] %v744
        %781 = vst [vmem:[%s280 + $0x50] sm:$0xff] %v747
        %782 = vst [vmem:[%s280 + $0x58] sm:$0xff] %v749
        %783 = vst [vmem:[%s280 + $0x60] sm:$0xff] %v752
        %784 = vst [vmem:[%s280 + $0x68] sm:$0xff] %v754
        %785 = vst [vmem:[%s280 + $0x70] sm:$0xff] %v757
        %786 = vst [vmem:[%s280 + $0x78] sm:$0xff] %v759
        %787 = vst [vmem:[%s280 + $0x80] sm:$0xff] %v762
        %788 = vst [vmem:[%s280 + $0x88] sm:$0xff] %v764
        %789 = vst [vmem:[%s280 + $0x90] sm:$0xff] %v767
        %790 = vst [vmem:[%s280 + $0x98] sm:$0xff] %v769
        %s791 = sand.u32 %s178, 1
        %s792 = sand.u32 %s178, 1
        %s793 = smul.addr %s792, 160
        %s794 = scalar_lea.vmem [#allocation2], %s793
        // Predicated region
        $region49: #{_mlp_forward_impl.1} parent=47 // pred_check
          %p795 = pneg %p188
        $region50: #{_mlp_forward_impl.1} parent=47 // pred_check_branch
          %797 = sbr.rel (%p795) target = $region52
        $region51: #{_mlp_forward_impl.1} parent=47 // pred_region
          %s798 = smul.u32 20, %s18
          %s799 = ssub.s32 38, %s798
          %p800 = scmp.lt.s32.totalorder %s799, 20
          %s801 = scalar_select %p800, %s799, 20
          %s802 = smul.u32 8, %s801
          %p803 = scmp.ne.s32.totalorder 0, %s802
          %s804 = smul.addr %s798, 8
          %s805 = scalar_lea.vmem %s7, %s804
          // Predicated region
          $region53: #{_mlp_forward_impl.1} parent=51 // pred_check
            %p806 = pneg %p803
          $region54: #{_mlp_forward_impl.1} parent=51 // pred_check_branch
            %808 = sbr.rel (%p806) target = $region56
          $region55: #{_mlp_forward_impl.1} parent=51 // pred_region
            // Predicated region
            $region57: #{_mlp_forward_impl.1} parent=55 // pred_check
              _
            $region58: #{_mlp_forward_impl.1} parent=55 // pred_check_branch
              %810 = sbr.rel (0) target = $region60
            $region59: #{_mlp_forward_impl.1} parent=55 // pred_region
              // Predicated region
              $region79: #{_mlp_forward_impl.1} parent=59 // pred_check
                _
              $region80: #{_mlp_forward_impl.1} parent=59 // pred_check_branch
                %899 = sbr.rel (0) target = $region82
              $region81: #{_mlp_forward_impl.1} parent=59 // pred_region
                %s900 = sdiv.u32.pop %s801, 20
                %s901 = srem.u32.pop %s801, 20
                // While loop
                $region83: #{_mlp_forward_impl.1} parent=81 // loop_pre_header
                  _
                $region84: #{_mlp_forward_impl.1} parent=81 // loop_header
                  %s903 = sphi 0, %s905
                  %p904 = scmp.ge.s32.totalorder %s903, %s900
                  %s908 = sphi 0, %s953
                  %s909 = sphi %s794, %s956
                  %s910 = sphi %s805, %s957
                $region85: #{_mlp_forward_impl.1} parent=81 // loop_header_branch
                  %907 = sbr.rel (%p904) target = $region89
                $region86: #{_mlp_forward_impl.1} parent=81 // loop_body
                  %v911 = vld [vmem:[%s909] sm:$0xff]
                  %912 = vst [vmem:[%s910] sm:$0xff] %v911
                  %v913 = vld [vmem:[%s909 + $0x8] sm:$0xff]
                  %914 = vst [vmem:[%s910 + $0x8] sm:$0xff] %v913
                  %v915 = vld [vmem:[%s909 + $0x10] sm:$0xff]
                  %916 = vst [vmem:[%s910 + $0x10] sm:$0xff] %v915
                  %v917 = vld [vmem:[%s909 + $0x18] sm:$0xff]
                  %918 = vst [vmem:[%s910 + $0x18] sm:$0xff] %v917
                  %v919 = vld [vmem:[%s909 + $0x20] sm:$0xff]
                  %920 = vst [vmem:[%s910 + $0x20] sm:$0xff] %v919
                  %v921 = vld [vmem:[%s909 + $0x28] sm:$0xff]
                  %922 = vst [vmem:[%s910 + $0x28] sm:$0xff] %v921
                  %v923 = vld [vmem:[%s909 + $0x30] sm:$0xff]
                  %924 = vst [vmem:[%s910 + $0x30] sm:$0xff] %v923
                  %v925 = vld [vmem:[%s909 + $0x38] sm:$0xff]
                  %926 = vst [vmem:[%s910 + $0x38] sm:$0xff] %v925
                  %v927 = vld [vmem:[%s909 + $0x40] sm:$0xff]
                  %928 = vst [vmem:[%s910 + $0x40] sm:$0xff] %v927
                  %v929 = vld [vmem:[%s909 + $0x48] sm:$0xff]
                  %930 = vst [vmem:[%s910 + $0x48] sm:$0xff] %v929
                  %v931 = vld [vmem:[%s909 + $0x50] sm:$0xff]
                  %932 = vst [vmem:[%s910 + $0x50] sm:$0xff] %v931
                  %v933 = vld [vmem:[%s909 + $0x58] sm:$0xff]
                  %934 = vst [vmem:[%s910 + $0x58] sm:$0xff] %v933
                  %v935 = vld [vmem:[%s909 + $0x60] sm:$0xff]
                  %936 = vst [vmem:[%s910 + $0x60] sm:$0xff] %v935
                  %v937 = vld [vmem:[%s909 + $0x68] sm:$0xff]
                  %938 = vst [vmem:[%s910 + $0x68] sm:$0xff] %v937
                  %v939 = vld [vmem:[%s909 + $0x70] sm:$0xff]
                  %940 = vst [vmem:[%s910 + $0x70] sm:$0xff] %v939
                  %v941 = vld [vmem:[%s909 + $0x78] sm:$0xff]
                  %942 = vst [vmem:[%s910 + $0x78] sm:$0xff] %v941
                  %v943 = vld [vmem:[%s909 + $0x80] sm:$0xff]
                  %944 = vst [vmem:[%s910 + $0x80] sm:$0xff] %v943
                  %v945 = vld [vmem:[%s909 + $0x88] sm:$0xff]
                  %946 = vst [vmem:[%s910 + $0x88] sm:$0xff] %v945
                  %v947 = vld [vmem:[%s909 + $0x90] sm:$0xff]
                  %948 = vst [vmem:[%s910 + $0x90] sm:$0xff] %v947
                  %v949 = vld [vmem:[%s909 + $0x98] sm:$0xff]
                  %950 = vst [vmem:[%s910 + $0x98] sm:$0xff] %v949
                  %s951 = sadd.s32 1, %s908
                  %p952 = scmp.ge.s32.totalorder %s951, %s900
                  %s953 = scalar_select %p952, 0, %s951
                  %s954 = smul.u32 %s953, 160
                  %s955 = smul.u32 %s953, 160
                  %s956 = scalar_lea.vmem %s794, %s954 [#allocation2]
                  %s957 = scalar_lea.vmem %s805, %s955
                $region87: #{_mlp_forward_impl.1} parent=81 // loop_footer
                  %s905 = sadd.s32 %s903, 1
                $region88: #{_mlp_forward_impl.1} parent=81 // loop_footer_branch
                  %902 = sbr.rel target = $region84
                $region89: #{_mlp_forward_impl.1} parent=81 // loop_exit
                  _
                %s958 = sdiv.u32.pop %s801, 20
                %s959 = srem.u32.pop %s801, 20
                %s960 = smul.u32 %s958, 20
                %s961 = smul.u32 8, %s960
                %s962 = scalar_lea.vmem %s794, %s961 [#allocation2]
                %s963 = smul.u32 8, %s960
                %s964 = scalar_lea.vmem %s805, %s963
                // While loop
                $region90: #{_mlp_forward_impl.1} parent=81 // loop_pre_header
                  _
                $region91: #{_mlp_forward_impl.1} parent=81 // loop_header
                  %s966 = sphi 0, %s968
                  %p967 = scmp.ge.s32.totalorder %s966, %s959
                  %s971 = sphi 0, %s978
                  %s972 = sphi %s962, %s981
                  %s973 = sphi %s964, %s982
                $region92: #{_mlp_forward_impl.1} parent=81 // loop_header_branch
                  %970 = sbr.rel (%p967) target = $region96
                $region93: #{_mlp_forward_impl.1} parent=81 // loop_body
                  %v974 = vld [vmem:[%s972] sm:$0xff]
                  %975 = vst [vmem:[%s973] sm:$0xff] %v974
                  %s976 = sadd.s32 1, %s971
                  %p977 = scmp.ge.s32.totalorder %s976, %s959
                  %s978 = scalar_select %p977, 0, %s976
                  %s979 = smul.u32 %s978, 8
                  %s980 = smul.u32 %s978, 8
                  %s981 = scalar_lea.vmem %s962, %s979 [#allocation2]
                  %s982 = scalar_lea.vmem %s964, %s980
                $region94: #{_mlp_forward_impl.1} parent=81 // loop_footer
                  %s968 = sadd.s32 %s966, 1
                $region95: #{_mlp_forward_impl.1} parent=81 // loop_footer_branch
                  %965 = sbr.rel target = $region91
                $region96: #{_mlp_forward_impl.1} parent=81 // loop_exit
                  _
              $region82: #{_mlp_forward_impl.1} parent=59 // pred_fallthru
                _
              // Predicated region
              $region97: #{_mlp_forward_impl.1} parent=59 // pred_check
                _
              $region98: #{_mlp_forward_impl.1} parent=59 // pred_check_branch
                %984 = sbr.rel target = $region100
              $region99: #{_mlp_forward_impl.1} parent=59 // pred_region
                _
              $region100: #{_mlp_forward_impl.1} parent=59 // pred_fallthru
                _
            $region60: #{_mlp_forward_impl.1} parent=55 // pred_fallthru
              _
            // Predicated region
            $region61: #{_mlp_forward_impl.1} parent=55 // pred_check
              _
            $region62: #{_mlp_forward_impl.1} parent=55 // pred_check_branch
              %812 = sbr.rel target = $region64
            $region63: #{_mlp_forward_impl.1} parent=55 // pred_region
              %s814 = ssub.s32 256, 1
              %s815 = sdiv.u32.pop %s801, 20
              %s816 = srem.u32.pop %s801, 20
              // While loop
              $region65: #{_mlp_forward_impl.1} parent=63 // loop_pre_header
                _
              $region66: #{_mlp_forward_impl.1} parent=63 // loop_header
                %s818 = sphi 0, %s820
                %p819 = scmp.ge.s32.totalorder %s818, %s815
                %s823 = sphi 0, %s868
                %s824 = sphi %s794, %s871
                %s825 = sphi %s805, %s872
              $region67: #{_mlp_forward_impl.1} parent=63 // loop_header_branch
                %822 = sbr.rel (%p819) target = $region71
              $region68: #{_mlp_forward_impl.1} parent=63 // loop_body
                %v826 = vld [vmem:[%s824] sm:%s814]
                %827 = vst [vmem:[%s825] sm:%s814] %v826
                %v828 = vld [vmem:[%s824 + $0x8] sm:%s814]
                %829 = vst [vmem:[%s825 + $0x8] sm:%s814] %v828
                %v830 = vld [vmem:[%s824 + $0x10] sm:%s814]
                %831 = vst [vmem:[%s825 + $0x10] sm:%s814] %v830
                %v832 = vld [vmem:[%s824 + $0x18] sm:%s814]
                %833 = vst [vmem:[%s825 + $0x18] sm:%s814] %v832
                %v834 = vld [vmem:[%s824 + $0x20] sm:%s814]
                %835 = vst [vmem:[%s825 + $0x20] sm:%s814] %v834
                %v836 = vld [vmem:[%s824 + $0x28] sm:%s814]
                %837 = vst [vmem:[%s825 + $0x28] sm:%s814] %v836
                %v838 = vld [vmem:[%s824 + $0x30] sm:%s814]
                %839 = vst [vmem:[%s825 + $0x30] sm:%s814] %v838
                %v840 = vld [vmem:[%s824 + $0x38] sm:%s814]
                %841 = vst [vmem:[%s825 + $0x38] sm:%s814] %v840
                %v842 = vld [vmem:[%s824 + $0x40] sm:%s814]
                %843 = vst [vmem:[%s825 + $0x40] sm:%s814] %v842
                %v844 = vld [vmem:[%s824 + $0x48] sm:%s814]
                %845 = vst [vmem:[%s825 + $0x48] sm:%s814] %v844
                %v846 = vld [vmem:[%s824 + $0x50] sm:%s814]
                %847 = vst [vmem:[%s825 + $0x50] sm:%s814] %v846
                %v848 = vld [vmem:[%s824 + $0x58] sm:%s814]
                %849 = vst [vmem:[%s825 + $0x58] sm:%s814] %v848
                %v850 = vld [vmem:[%s824 + $0x60] sm:%s814]
                %851 = vst [vmem:[%s825 + $0x60] sm:%s814] %v850
                %v852 = vld [vmem:[%s824 + $0x68] sm:%s814]
                %853 = vst [vmem:[%s825 + $0x68] sm:%s814] %v852
                %v854 = vld [vmem:[%s824 + $0x70] sm:%s814]
                %855 = vst [vmem:[%s825 + $0x70] sm:%s814] %v854
                %v856 = vld [vmem:[%s824 + $0x78] sm:%s814]
                %857 = vst [vmem:[%s825 + $0x78] sm:%s814] %v856
                %v858 = vld [vmem:[%s824 + $0x80] sm:%s814]
                %859 = vst [vmem:[%s825 + $0x80] sm:%s814] %v858
                %v860 = vld [vmem:[%s824 + $0x88] sm:%s814]
                %861 = vst [vmem:[%s825 + $0x88] sm:%s814] %v860
                %v862 = vld [vmem:[%s824 + $0x90] sm:%s814]
                %863 = vst [vmem:[%s825 + $0x90] sm:%s814] %v862
                %v864 = vld [vmem:[%s824 + $0x98] sm:%s814]
                %865 = vst [vmem:[%s825 + $0x98] sm:%s814] %v864
                %s866 = sadd.s32 1, %s823
                %p867 = scmp.ge.s32.totalorder %s866, %s815
                %s868 = scalar_select %p867, 0, %s866
                %s869 = smul.u32 %s868, 160
                %s870 = smul.u32 %s868, 160
                %s871 = scalar_lea.vmem %s794, %s869 [#allocation2]
                %s872 = scalar_lea.vmem %s805, %s870
              $region69: #{_mlp_forward_impl.1} parent=63 // loop_footer
                %s820 = sadd.s32 %s818, 1
              $region70: #{_mlp_forward_impl.1} parent=63 // loop_footer_branch
                %817 = sbr.rel target = $region66
              $region71: #{_mlp_forward_impl.1} parent=63 // loop_exit
                _
              %s873 = sdiv.u32.pop %s801, 20
              %s874 = srem.u32.pop %s801, 20
              %s875 = smul.u32 %s873, 20
              %s876 = smul.u32 8, %s875
              %s877 = scalar_lea.vmem %s794, %s876 [#allocation2]
              %s878 = smul.u32 8, %s875
              %s879 = scalar_lea.vmem %s805, %s878
              // While loop
              $region72: #{_mlp_forward_impl.1} parent=63 // loop_pre_header
                _
              $region73: #{_mlp_forward_impl.1} parent=63 // loop_header
                %s881 = sphi 0, %s883
                %p882 = scmp.ge.s32.totalorder %s881, %s874
                %s886 = sphi 0, %s893
                %s887 = sphi %s877, %s896
                %s888 = sphi %s879, %s897
              $region74: #{_mlp_forward_impl.1} parent=63 // loop_header_branch
                %885 = sbr.rel (%p882) target = $region78
              $region75: #{_mlp_forward_impl.1} parent=63 // loop_body
                %v889 = vld [vmem:[%s887] sm:%s814]
                %890 = vst [vmem:[%s888] sm:%s814] %v889
                %s891 = sadd.s32 1, %s886
                %p892 = scmp.ge.s32.totalorder %s891, %s874
                %s893 = scalar_select %p892, 0, %s891
                %s894 = smul.u32 %s893, 8
                %s895 = smul.u32 %s893, 8
                %s896 = scalar_lea.vmem %s877, %s894 [#allocation2]
                %s897 = scalar_lea.vmem %s879, %s895
              $region76: #{_mlp_forward_impl.1} parent=63 // loop_footer
                %s883 = sadd.s32 %s881, 1
              $region77: #{_mlp_forward_impl.1} parent=63 // loop_footer_branch
                %880 = sbr.rel target = $region73
              $region78: #{_mlp_forward_impl.1} parent=63 // loop_exit
                _
            $region64: #{_mlp_forward_impl.1} parent=55 // pred_fallthru
              _
          $region56: #{_mlp_forward_impl.1} parent=51 // pred_fallthru
            _
          %985 = vnop
        $region52: #{_mlp_forward_impl.1} parent=47 // pred_fallthru
          _
      $region48: #{_mlp_forward_impl.1} parent=5 // pred_fallthru
        _
      %p986 = scmp.le.s32.totalorder 2, %s13
      // Predicated region
      $region101: #{_mlp_forward_impl.1} parent=5 // pred_check
        %p987 = pneg %p986
      $region102: #{_mlp_forward_impl.1} parent=5 // pred_check_branch
        %989 = sbr.rel (%p987) target = $region104
      $region103: #{_mlp_forward_impl.1} parent=5 // pred_region
        %s990 = ssub.s32 %s13, 2
        // Predicated region
        $region105: #{_mlp_forward_impl.1} parent=103 // pred_check
          %p991 = pneg %p194
        $region106: #{_mlp_forward_impl.1} parent=103 // pred_check_branch
          %993 = sbr.rel (%p991) target = $region108
        $region107: #{_mlp_forward_impl.1} parent=103 // pred_region
          %s994 = sand.u32 %s179, 1
          %s995 = sand.u32 %s179, 1
          %s996 = smul.addr %s995, 160
          %s997 = scalar_lea.vmem [#allocation2], %s996
        $region108: #{_mlp_forward_impl.1} parent=103 // pred_fallthru
          _
      $region104: #{_mlp_forward_impl.1} parent=5 // pred_fallthru
        _
    $region6: #{_mlp_forward_impl.1} parent=1 // loop_footer
      %s17 = sadd.s32 1, %s13
    $region7: #{_mlp_forward_impl.1} parent=1 // loop_footer_branch
      %12 = sbr.rel target = $region3
    $region8: #{_mlp_forward_impl.1} parent=1 // loop_exit
      _

</llo_original>
